<compile_context>
chip_gen: v6e
topology: v6e:2x2x1
jax: 0.10.0
libtpu: 0.0.40
codegen_flags: <defaults>
</compile_context>

<pallas_src>
import jax
import jax.numpy as jnp
from jax.experimental import pallas as pl
from jax.experimental.pallas import tpu as pltpu

# ----------------------------------------------------------------------------
# Model configuration (mirrors args.state_dim / args.ls1 / args.ls2 /
# args.action_dim / args.use_ln of the PyTorch module)
# ----------------------------------------------------------------------------
BATCH = 256           # gridded over the batch; must be a multiple of TILE_B
TILE_B = 128          # activation rows per grid step (2 steps -> both v7x TCs)
STATE_DIM = 32
L1 = 64
L2 = 64
ACTION_DIM = 16
USE_LN = True
LN_EPS = 1e-6

PAD = 128             # lane width of the packed parameter slab

# Row layout of the packed parameter slab ([P_ROWS, PAD] f32, real row counts)
W1_ROW = 0                         # rows [0, 32)   : W1  [32, 64]  in lanes [0, 64)
W2_ROW = STATE_DIM                 # rows [32, 96)  : W2  [64, 64]  in lanes [0, 64)
W3_ROW = STATE_DIM + L1            # rows [96, 160) : W3  [64, 16]  in lanes [0, 16)
B1_ROW = STATE_DIM + L1 + L2       # 160
G1_ROW = B1_ROW + 1                # 161
BE1_ROW = B1_ROW + 2               # 162
B2_ROW = B1_ROW + 3                # 163
G2_ROW = B1_ROW + 4                # 164
BE2_ROW = B1_ROW + 5               # 165
B3_ROW = B1_ROW + 6                # 166
P_ROWS = B1_ROW + 8                # 168 (vector rows padded to 8 sublanes)


# ----------------------------------------------------------------------------
# Kernel
# ----------------------------------------------------------------------------
def _layer_norm(h, gamma, beta):
    """PyTorch-style LayerNorm: unbiased (N-1) std, divide by (std + eps).

    Two-pass form (mean, then centered sum of squares) for numerical safety.
    """
    n = h.shape[-1]
    mean = jnp.mean(h, axis=-1, keepdims=True)
    d = h - mean
    var = jnp.sum(d * d, axis=-1, keepdims=True) * (1.0 / (n - 1))
    inv = pl.reciprocal(jnp.sqrt(var) + LN_EPS, approx=False)  # one per row
    return gamma * d * inv + beta


def actor_kernel(x_ref, p_ref, o_ref):
    """Full Actor forward at real feature widths: 32 -> 64 -> 64 -> 16."""
    x = x_ref[...]                                          # [TILE_B, 32]

    # Full 128-lane loads from the slab (lane-dense), narrowed on the values.
    w1 = p_ref[W1_ROW:W1_ROW + STATE_DIM, :][:, :L1]        # [32, 64]
    w2 = p_ref[W2_ROW:W2_ROW + L1, :][:, :L2]               # [64, 64]
    w3 = p_ref[W3_ROW:W3_ROW + L2, :][:, :ACTION_DIM]       # [64, 16]
    b1 = p_ref[B1_ROW:B1_ROW + 1, :][:, :L1]                # [1, 64]
    b2 = p_ref[B2_ROW:B2_ROW + 1, :][:, :L2]                # [1, 64]
    b3 = p_ref[B3_ROW:B3_ROW + 1, :][:, :ACTION_DIM]        # [1, 16]

    # layer 1
    h = jnp.dot(x, w1, preferred_element_type=jnp.float32) + b1
    if USE_LN:
        g1 = p_ref[G1_ROW:G1_ROW + 1, :][:, :L1]
        be1 = p_ref[BE1_ROW:BE1_ROW + 1, :][:, :L1]
        h = _layer_norm(h, g1, be1)
    h = jnp.tanh(h)

    # layer 2
    h = jnp.dot(h, w2, preferred_element_type=jnp.float32) + b2
    if USE_LN:
        g2 = p_ref[G2_ROW:G2_ROW + 1, :][:, :L2]
        be2 = p_ref[BE2_ROW:BE2_ROW + 1, :][:, :L2]
        h = _layer_norm(h, g2, be2)
    h = jnp.tanh(h)

    # output layer: store the real (TILE_B, 16) action block directly
    o_ref[...] = jnp.tanh(jnp.dot(h, w3, preferred_element_type=jnp.float32) + b3)


# ----------------------------------------------------------------------------
# Wrapper
# ----------------------------------------------------------------------------
def actor_forward(x, p_slab):
    b = x.shape[0]
    assert b % TILE_B == 0, "batch must be a multiple of TILE_B"
    # TODO(synk): arbitrary batch sizes would need a pl.cdiv grid + last-tile
    # masking; the module's usage (fixed replay-buffer batches) doesn't.

    return pl.pallas_call(
        actor_kernel,
        out_shape=jax.ShapeDtypeStruct((b, ACTION_DIM), jnp.float32),
        grid_spec=pltpu.PrefetchScalarGridSpec(
            num_scalar_prefetch=0,
            grid=(b // TILE_B,),
            in_specs=[
                # activations stream over the batch grid axis; last block dim
                # (32) equals the full array dim, so no lane padding needed
                pl.BlockSpec((TILE_B, STATE_DIM), lambda i: (i, 0)),
                # parameter slab: constant index_map -> fetched once,
                # VMEM-resident across all grid steps
                pl.BlockSpec((P_ROWS, PAD), lambda i: (0, 0)),
            ],
            # output block last dim (16) equals the full array dim
            out_specs=pl.BlockSpec((TILE_B, ACTION_DIM), lambda i: (i, 0)),
        ),
        compiler_params=pltpu.CompilerParams(
            dimension_semantics=("parallel",)),   # one step per TC on v7x
    )(x, p_slab)


# ----------------------------------------------------------------------------
# Parameter init / packing / pure-JAX reference
# ----------------------------------------------------------------------------
def init_params(key):
    """Synthetic params (shapes match nn.Linear / LayerNorm), kernel layout [in, out]."""
    ks = jax.random.split(key, 6)
    w1 = jax.random.normal(ks[0], (L1, STATE_DIM), jnp.float32) * 0.1   # torch [out, in]
    b1 = jax.random.normal(ks[1], (L1,), jnp.float32) * 0.1
    w2 = jax.random.normal(ks[2], (L2, L1), jnp.float32) * 0.1
    b2 = jax.random.normal(ks[3], (L2,), jnp.float32) * 0.1
    w3 = jax.random.normal(ks[4], (ACTION_DIM, L2), jnp.float32) * 0.1
    b3 = jax.random.normal(ks[5], (ACTION_DIM,), jnp.float32) * 0.1
    g1 = jnp.ones((L1,), jnp.float32)
    be1 = jnp.zeros((L1,), jnp.float32)
    g2 = jnp.ones((L2,), jnp.float32)
    be2 = jnp.zeros((L2,), jnp.float32)
    return (w1.T, b1, g1, be1, w2.T, b2, g2, be2, w3.T, b3)


def pack_params(raw):
    """Pack all parameters into one lane-dense [168, 128] f32 slab (host-side, once)."""
    (w1, b1, g1, be1, w2, b2, g2, be2, w3, b3) = raw

    def pad_mat(w):   # w is [in, out]; keep real row count, pad lanes to 128
        return jnp.zeros((w.shape[0], PAD), jnp.float32).at[:, :w.shape[1]].set(w)

    def pad_vec(v):
        return jnp.zeros((PAD,), jnp.float32).at[:v.shape[0]].set(v)

    vec_rows = jnp.stack([
        pad_vec(b1), pad_vec(g1), pad_vec(be1),
        pad_vec(b2), pad_vec(g2), pad_vec(be2),
        pad_vec(b3), jnp.zeros((PAD,), jnp.float32),
    ], axis=0)
    slab = jnp.concatenate([pad_mat(w1), pad_mat(w2), pad_mat(w3), vec_rows], axis=0)
    assert slab.shape == (P_ROWS, PAD)
    return slab


def actor_reference(x, raw):
    """Pure-JAX reference of the exact PyTorch math (two-pass LN, unpadded)."""
    (w1, b1, g1, be1, w2, b2, g2, be2, w3, b3) = raw

    def ln(h, g, bt):
        n = h.shape[-1]
        mean = jnp.mean(h, axis=-1, keepdims=True)
        var = jnp.sum((h - mean) ** 2, axis=-1, keepdims=True) / (n - 1)
        return g * (h - mean) / (jnp.sqrt(var) + LN_EPS) + bt

    h = x @ w1 + b1
    if USE_LN:
        h = ln(h, g1, be1)
    h = jnp.tanh(h)
    h = h @ w2 + b2
    if USE_LN:
        h = ln(h, g2, be2)
    h = jnp.tanh(h)
    return jnp.tanh(h @ w3 + b3)


if __name__ == "__main__":
    key = jax.random.PRNGKey(0)
    k_x, k_p = jax.random.split(key)

    x = jax.random.normal(k_x, (BATCH, STATE_DIM), jnp.float32)
    raw = init_params(k_p)
    slab = pack_params(raw)

    out = actor_forward(x, slab)
    out = jax.block_until_ready(out)

    ref = actor_reference(x, raw)
    assert out.shape == (BATCH, ACTION_DIM)
    max_err = float(jnp.max(jnp.abs(out - ref)))
    assert jnp.allclose(out, ref, atol=1e-4, rtol=1e-4), f"mismatch vs reference ({max_err})"

    print("KERNEL_OK")
</pallas_src>

<mosaic_0001>
module attributes {stable_mosaic.version = 11 : i64} {
  func.func @actor_kernel(%arg0: i32, %arg1: memref<128x32xf32, #tpu.memory_space<vmem>>, %arg2: memref<168x128xf32, #tpu.memory_space<vmem>>, %arg3: memref<128x16xf32, #tpu.memory_space<vmem>>) attributes {dimension_semantics = [#tpu.dimension_semantics<parallel>], iteration_bounds = array<i64: 2>, scalar_prefetch = 0 : i64, scratch_operands = 0 : i64, tpu.core_type = #tpu.core_type<tc>, window_params = [{transform_indices = @transform_0, window_bounds = array<i64: 128, 32>}, {pipeline_mode = #tpu.pipeline_mode<synchronous>, transform_indices = @transform_1, window_bounds = array<i64: 168, 128>}, {transform_indices = @transform_2, window_bounds = array<i64: 128, 16>}]} {
    %c0 = arith.constant 0 : index
    %c0_0 = arith.constant 0 : index
    %0 = vector.load %arg1[%c0, %c0_0] : memref<128x32xf32, #tpu.memory_space<vmem>>, vector<128x32xf32>
    %c0_1 = arith.constant 0 : index
    %c0_2 = arith.constant 0 : index
    %1 = vector.load %arg2[%c0_1, %c0_2] : memref<168x128xf32, #tpu.memory_space<vmem>>, vector<32x128xf32>
    %2 = vector.extract_strided_slice %1 {offsets = [0, 0], sizes = [32, 64], strides = [1, 1]} : vector<32x128xf32> to vector<32x64xf32>
    %c32 = arith.constant 32 : index
    %c0_3 = arith.constant 0 : index
    %3 = vector.load %arg2[%c32, %c0_3] : memref<168x128xf32, #tpu.memory_space<vmem>>, vector<64x128xf32>
    %4 = vector.extract_strided_slice %3 {offsets = [0, 0], sizes = [64, 64], strides = [1, 1]} : vector<64x128xf32> to vector<64x64xf32>
    %c96 = arith.constant 96 : index
    %c0_4 = arith.constant 0 : index
    %5 = vector.load %arg2[%c96, %c0_4] : memref<168x128xf32, #tpu.memory_space<vmem>>, vector<64x128xf32>
    %6 = vector.extract_strided_slice %5 {offsets = [0, 0], sizes = [64, 16], strides = [1, 1]} : vector<64x128xf32> to vector<64x16xf32>
    %c160 = arith.constant 160 : index
    %c0_5 = arith.constant 0 : index
    %7 = vector.load %arg2[%c160, %c0_5] : memref<168x128xf32, #tpu.memory_space<vmem>>, vector<1x128xf32>
    %8 = vector.extract_strided_slice %7 {offsets = [0, 0], sizes = [1, 64], strides = [1, 1]} : vector<1x128xf32> to vector<1x64xf32>
    %c163 = arith.constant 163 : index
    %c0_6 = arith.constant 0 : index
    %9 = vector.load %arg2[%c163, %c0_6] : memref<168x128xf32, #tpu.memory_space<vmem>>, vector<1x128xf32>
    %10 = vector.extract_strided_slice %9 {offsets = [0, 0], sizes = [1, 64], strides = [1, 1]} : vector<1x128xf32> to vector<1x64xf32>
    %c166 = arith.constant 166 : index
    %c0_7 = arith.constant 0 : index
    %11 = vector.load %arg2[%c166, %c0_7] : memref<168x128xf32, #tpu.memory_space<vmem>>, vector<1x128xf32>
    %12 = vector.extract_strided_slice %11 {offsets = [0, 0], sizes = [1, 16], strides = [1, 1]} : vector<1x128xf32> to vector<1x16xf32>
    %cst = arith.constant dense<0.000000e+00> : vector<128x64xf32>
    %13 = tpu.matmul %0, %2, %cst {dimension_numbers = #tpu.dot_dimension_numbers<[1], [0], [0], [1], [0, 0, 1, 1], [], []>} : vector<128x32xf32>, vector<32x64xf32>, vector<128x64xf32> -> vector<128x64xf32>
    %14 = vector.broadcast %8 : vector<1x64xf32> to vector<128x64xf32>
    %15 = arith.addf %13, %14 : vector<128x64xf32>
    %c161 = arith.constant 161 : index
    %c0_8 = arith.constant 0 : index
    %16 = vector.load %arg2[%c161, %c0_8] : memref<168x128xf32, #tpu.memory_space<vmem>>, vector<1x128xf32>
    %17 = vector.extract_strided_slice %16 {offsets = [0, 0], sizes = [1, 64], strides = [1, 1]} : vector<1x128xf32> to vector<1x64xf32>
    %c162 = arith.constant 162 : index
    %c0_9 = arith.constant 0 : index
    %18 = vector.load %arg2[%c162, %c0_9] : memref<168x128xf32, #tpu.memory_space<vmem>>, vector<1x128xf32>
    %19 = vector.extract_strided_slice %18 {offsets = [0, 0], sizes = [1, 64], strides = [1, 1]} : vector<1x128xf32> to vector<1x64xf32>
    %cst_10 = arith.constant dense<0.000000e+00> : vector<128xf32>
    %20 = vector.multi_reduction <add>, %15, %cst_10 [1] : vector<128x64xf32> to vector<128xf32>
    %21 = vector.shape_cast %20 : vector<128xf32> to vector<128x1xf32>
    %cst_11 = arith.constant 6.400000e+01 : f32
    %22 = vector.broadcast %cst_11 : f32 to vector<128x1xf32>
    %23 = arith.divf %21, %22 : vector<128x1xf32>
    %24 = vector.broadcast %23 : vector<128x1xf32> to vector<128x64xf32>
    %25 = arith.subf %15, %24 : vector<128x64xf32>
    %26 = arith.mulf %25, %25 : vector<128x64xf32>
    %cst_12 = arith.constant dense<0.000000e+00> : vector<128xf32>
    %27 = vector.multi_reduction <add>, %26, %cst_12 [1] : vector<128x64xf32> to vector<128xf32>
    %28 = vector.shape_cast %27 : vector<128xf32> to vector<128x1xf32>
    %cst_13 = arith.constant 0.0158730168 : f32
    %29 = vector.broadcast %cst_13 : f32 to vector<128x1xf32>
    %30 = arith.mulf %28, %29 : vector<128x1xf32>
    %31 = math.sqrt %30 : vector<128x1xf32>
    %cst_14 = arith.constant 9.99999997E-7 : f32
    %32 = vector.broadcast %cst_14 : f32 to vector<128x1xf32>
    %33 = arith.addf %31, %32 : vector<128x1xf32>
    %34 = tpu.reciprocal %33 : vector<128x1xf32> -> vector<128x1xf32>
    %35 = vector.broadcast %17 : vector<1x64xf32> to vector<128x64xf32>
    %36 = arith.mulf %35, %25 : vector<128x64xf32>
    %37 = vector.broadcast %34 : vector<128x1xf32> to vector<128x64xf32>
    %38 = arith.mulf %36, %37 : vector<128x64xf32>
    %39 = vector.broadcast %19 : vector<1x64xf32> to vector<128x64xf32>
    %40 = arith.addf %38, %39 : vector<128x64xf32>
    %41 = math.tanh %40 : vector<128x64xf32>
    %cst_15 = arith.constant dense<0.000000e+00> : vector<128x64xf32>
    %42 = tpu.matmul %41, %4, %cst_15 {dimension_numbers = #tpu.dot_dimension_numbers<[1], [0], [0], [1], [0, 0, 1, 1], [], []>} : vector<128x64xf32>, vector<64x64xf32>, vector<128x64xf32> -> vector<128x64xf32>
    %43 = vector.broadcast %10 : vector<1x64xf32> to vector<128x64xf32>
    %44 = arith.addf %42, %43 : vector<128x64xf32>
    %c164 = arith.constant 164 : index
    %c0_16 = arith.constant 0 : index
    %45 = vector.load %arg2[%c164, %c0_16] : memref<168x128xf32, #tpu.memory_space<vmem>>, vector<1x128xf32>
    %46 = vector.extract_strided_slice %45 {offsets = [0, 0], sizes = [1, 64], strides = [1, 1]} : vector<1x128xf32> to vector<1x64xf32>
    %c165 = arith.constant 165 : index
    %c0_17 = arith.constant 0 : index
    %47 = vector.load %arg2[%c165, %c0_17] : memref<168x128xf32, #tpu.memory_space<vmem>>, vector<1x128xf32>
    %48 = vector.extract_strided_slice %47 {offsets = [0, 0], sizes = [1, 64], strides = [1, 1]} : vector<1x128xf32> to vector<1x64xf32>
    %cst_18 = arith.constant dense<0.000000e+00> : vector<128xf32>
    %49 = vector.multi_reduction <add>, %44, %cst_18 [1] : vector<128x64xf32> to vector<128xf32>
    %50 = vector.shape_cast %49 : vector<128xf32> to vector<128x1xf32>
    %cst_19 = arith.constant 6.400000e+01 : f32
    %51 = vector.broadcast %cst_19 : f32 to vector<128x1xf32>
    %52 = arith.divf %50, %51 : vector<128x1xf32>
    %53 = vector.broadcast %52 : vector<128x1xf32> to vector<128x64xf32>
    %54 = arith.subf %44, %53 : vector<128x64xf32>
    %55 = arith.mulf %54, %54 : vector<128x64xf32>
    %cst_20 = arith.constant dense<0.000000e+00> : vector<128xf32>
    %56 = vector.multi_reduction <add>, %55, %cst_20 [1] : vector<128x64xf32> to vector<128xf32>
    %57 = vector.shape_cast %56 : vector<128xf32> to vector<128x1xf32>
    %cst_21 = arith.constant 0.0158730168 : f32
    %58 = vector.broadcast %cst_21 : f32 to vector<128x1xf32>
    %59 = arith.mulf %57, %58 : vector<128x1xf32>
    %60 = math.sqrt %59 : vector<128x1xf32>
    %cst_22 = arith.constant 9.99999997E-7 : f32
    %61 = vector.broadcast %cst_22 : f32 to vector<128x1xf32>
    %62 = arith.addf %60, %61 : vector<128x1xf32>
    %63 = tpu.reciprocal %62 : vector<128x1xf32> -> vector<128x1xf32>
    %64 = vector.broadcast %46 : vector<1x64xf32> to vector<128x64xf32>
    %65 = arith.mulf %64, %54 : vector<128x64xf32>
    %66 = vector.broadcast %63 : vector<128x1xf32> to vector<128x64xf32>
    %67 = arith.mulf %65, %66 : vector<128x64xf32>
    %68 = vector.broadcast %48 : vector<1x64xf32> to vector<128x64xf32>
    %69 = arith.addf %67, %68 : vector<128x64xf32>
    %70 = math.tanh %69 : vector<128x64xf32>
    %cst_23 = arith.constant dense<0.000000e+00> : vector<128x16xf32>
    %71 = tpu.matmul %70, %6, %cst_23 {dimension_numbers = #tpu.dot_dimension_numbers<[1], [0], [0], [1], [0, 0, 1, 1], [], []>} : vector<128x64xf32>, vector<64x16xf32>, vector<128x16xf32> -> vector<128x16xf32>
    %72 = vector.broadcast %12 : vector<1x16xf32> to vector<128x16xf32>
    %73 = arith.addf %71, %72 : vector<128x16xf32>
    %74 = math.tanh %73 : vector<128x16xf32>
    %c0_24 = arith.constant 0 : index
    %c0_25 = arith.constant 0 : index
    %75 = vector.load %arg3[%c0_24, %c0_25] : memref<128x16xf32, #tpu.memory_space<vmem>>, vector<128x16xf32>
    tpu.vector_store %arg3[%c0_24, %c0_25], %74 {strides = array<i32>} : memref<128x16xf32, #tpu.memory_space<vmem>>, vector<128x16xf32>,
    return
  }
  func.func @transform_0(%arg0: i32) -> (i32, i32) {
    %c0_i32 = arith.constant 0 : i32
    %c0_i32_0 = arith.constant 0 : i32
    return %arg0, %c0_i32 : i32, i32
  }
  func.func @transform_1(%arg0: i32) -> (i32, i32) {
    %c0_i32 = arith.constant 0 : i32
    %c0_i32_0 = arith.constant 0 : i32
    %c0_i32_1 = arith.constant 0 : i32
    return %c0_i32, %c0_i32_0 : i32, i32
  }
  func.func @transform_2(%arg0: i32) -> (i32, i32) {
    %c0_i32 = arith.constant 0 : i32
    %c0_i32_0 = arith.constant 0 : i32
    return %arg0, %c0_i32 : i32, i32
  }
}

</mosaic_0001>

<llo_original>
// kernel: tpu_custom_call.1
$region0: #{tpu_custom_call.1}
  #allocation0 [shape = 'u32[]', space=smem, size = 0x4, offset = 0x4, fixed_abs, tag = 'smem constant byte address 0x4 - core index']
  #allocation1 [shape = 'u32[144,128]{1,0:T(1,128)}', space=vmem, size = 0x12000, scoped, tag = 'internal scratch']
  %s0 = inlined_call_operand.vmem [shape: f32[256,32], index: 0, kind: input, shape index: {}]
  %s1 = inlined_call_operand.vmem [shape: f32[168,128], index: 1, kind: input, shape index: {}]
  %s2 = inlined_call_operand.vmem [shape: f32[256,16], index: 2, kind: output, shape index: {}]
  %s3 = sld [smem:[#allocation0]]
  $region41: #{tpu_custom_call.1} parent=0
    _
  %s5 = ssub.s32 1, %s3
  %s6 = scalar_select 0, %s5, %s3
  loop: start=0, step=1, limit=4
  $region2: #{tpu_custom_call.1} parent=0 // loop_pre_header
    _
  $region3: #{tpu_custom_call.1} parent=0 // loop_header
    %s8 = sphi 0, %s12
    %p9 = scmp.ge.s32.totalorder %s8, 4
    %s18 = sphi 0, %s20
    %s21 = sphi 0, %s18
    %s22 = sphi 0, %s21
    %s38 = sphi 0, %s22
    %s42 = sphi 0, %s42
    %s44 = sphi 0, %s42
    %s45 = sphi 0, %s44
    %s59 = sphi 0, %s45
    %s65 = sphi 0, %s67
    %s68 = sphi 0, %s65
    %s69 = sphi 0, %s68
    %s85 = sphi 0, %s69
  $region4: #{tpu_custom_call.1} parent=0 // loop_header_branch
    %11 = sbr.rel (%p9) target = $region8
  $region5: #{tpu_custom_call.1} parent=0 // loop_body
    %s13 = ssub.s32 %s8, 1
    %s14 = ssub.s32 %s8, 2
    %s15 = sadd.s32 %s8, 1
    %s16 = ssub.s32 %s8, %s15
    %p17 = scmp.eq.s32.totalorder %s16, 0
    %s19 = sadd.s32 %s18, 1
    %s20 = scalar_select %p17, %s18, %s19
    %p23 = pneg %p17
    %p24 = scmp.eq.s32.totalorder %s8, 1
    %p25 = por %p23, %p24
    %p26 = scmp.ne.s32.totalorder %s18, %s21
    %p27 = scmp.eq.s32.totalorder %s8, 0
    %p28 = por %p26, %p27
    %p29 = scmp.ne.s32.totalorder %s18, %s21
    %p30 = scmp.eq.s32.totalorder %s13, 1
    %p31 = por %p29, %p30
    %p32 = scmp.ne.s32.totalorder %s21, %s22
    %p33 = scmp.eq.s32.totalorder %s13, 0
    %p34 = por %p32, %p33
    %p35 = scmp.ne.s32.totalorder %s21, %s22
    %p36 = scmp.eq.s32.totalorder %s14, 1
    %p37 = por %p35, %p36
    %p39 = scmp.ne.s32.totalorder %s22, %s38
    %p40 = scmp.eq.s32.totalorder %s14, 0
    %p41 = por %p39, %p40
    %s43 = sadd.s32 %s42, 1
    %p46 = scmp.eq.s32.totalorder %s8, 1
    %p47 = scmp.ne.s32.totalorder %s42, %s44
    %p48 = scmp.eq.s32.totalorder %s8, 0
    %p49 = por %p47, %p48
    %p50 = scmp.ne.s32.totalorder %s42, %s44
    %p51 = scmp.eq.s32.totalorder %s13, 1
    %p52 = por %p50, %p51
    %p53 = scmp.ne.s32.totalorder %s44, %s45
    %p54 = scmp.eq.s32.totalorder %s13, 0
    %p55 = por %p53, %p54
    %p56 = scmp.ne.s32.totalorder %s44, %s45
    %p57 = scmp.eq.s32.totalorder %s14, 1
    %p58 = por %p56, %p57
    %p60 = scmp.ne.s32.totalorder %s45, %s59
    %p61 = scmp.eq.s32.totalorder %s14, 0
    %p62 = por %p60, %p61
    %s63 = ssub.s32 %s8, %s15
    %p64 = scmp.eq.s32.totalorder %s63, 0
    %s66 = sadd.s32 %s65, 1
    %s67 = scalar_select %p64, %s65, %s66
    %p70 = pneg %p64
    %p71 = scmp.eq.s32.totalorder %s8, 1
    %p72 = por %p70, %p71
    %p73 = scmp.ne.s32.totalorder %s65, %s68
    %p74 = scmp.eq.s32.totalorder %s8, 0
    %p75 = por %p73, %p74
    %p76 = scmp.ne.s32.totalorder %s65, %s68
    %p77 = scmp.eq.s32.totalorder %s13, 1
    %p78 = por %p76, %p77
    %p79 = scmp.ne.s32.totalorder %s68, %s69
    %p80 = scmp.eq.s32.totalorder %s13, 0
    %p81 = por %p79, %p80
    %p82 = scmp.ne.s32.totalorder %s68, %s69
    %p83 = scmp.eq.s32.totalorder %s14, 1
    %p84 = por %p82, %p83
    %p86 = scmp.ne.s32.totalorder %s69, %s85
    %p87 = scmp.eq.s32.totalorder %s14, 0
    %p88 = por %p86, %p87
    %p89 = scmp.le.s32.totalorder 1, %s8
    %p90 = scmp.lt.s32.totalorder %s8, 3
    %p91 = pnand %p89, %p90
    %p92 = pneg %p91
    // Predicated region
    $region9: #{tpu_custom_call.1} parent=5 // pred_check
      _
    $region10: #{tpu_custom_call.1} parent=5 // pred_check_branch
      %94 = sbr.rel (%p91) target = $region12
    $region11: #{tpu_custom_call.1} parent=5 // pred_region
      %s95 = ssub.s32 %s8, 1
      // Predicated region
      $region13: #{tpu_custom_call.1} parent=11 // pred_check
        %p96 = pneg %p55
      $region14: #{tpu_custom_call.1} parent=11 // pred_check_branch
        %98 = sbr.rel (%p96) target = $region16
      $region15: #{tpu_custom_call.1} parent=11 // pred_region
        _
      $region16: #{tpu_custom_call.1} parent=11 // pred_fallthru
        _
    $region12: #{tpu_custom_call.1} parent=5 // pred_fallthru
      _
    %p99 = scmp.lt.s32.totalorder %s8, 2
    // Predicated region
    $region17: #{tpu_custom_call.1} parent=5 // pred_check
      %p100 = pneg %p99
    $region18: #{tpu_custom_call.1} parent=5 // pred_check_branch
      %102 = sbr.rel (%p100) target = $region20
    $region19: #{tpu_custom_call.1} parent=5 // pred_region
      // Predicated region
      $region21: #{tpu_custom_call.1} parent=19 // pred_check
        %p103 = pneg %p28
      $region22: #{tpu_custom_call.1} parent=19 // pred_check_branch
        %105 = sbr.rel (%p103) target = $region24
      $region23: #{tpu_custom_call.1} parent=19 // pred_region
        %s106 = smul.u32 16, %s8
        %p107 = scmp.lt.s32.totalorder %s106, 31
        %s108 = scalar_select %p107, %s106, 31
        %s109 = smul.addr %s108, 8
        %s110 = scalar_lea.vmem %s0, %s109
        %s111 = smul.u32 16, %s8
      $region24: #{tpu_custom_call.1} parent=19 // pred_fallthru
        _
    $region20: #{tpu_custom_call.1} parent=5 // pred_fallthru
      _
    %p112 = scmp.le.s32.totalorder 1, %s8
    %p113 = scmp.lt.s32.totalorder %s8, 3
    %p114 = pnand %p112, %p113
    %p115 = pneg %p114
    // Predicated region
    $region25: #{tpu_custom_call.1} parent=5 // pred_check
      _
    $region26: #{tpu_custom_call.1} parent=5 // pred_check_branch
      %117 = sbr.rel (%p114) target = $region28
    $region27: #{tpu_custom_call.1} parent=5 // pred_region
      %s118 = ssub.s32 %s8, 1
      %s119 = smul.u32 16, %s13
      %p120 = scmp.lt.s32.totalorder %s119, 31
      %s121 = scalar_select %p120, %s119, 31
      %s122 = smul.addr %s121, 8
      %s123 = scalar_lea.vmem %s0, %s122
      %p124 = pneg %p34
      %p125 = pneg %p31
      %p126 = pneg %p55
      %p127 = pneg %p52
      %p128 = pneg %p81
      %p129 = pneg %p78
      %s130 = smul.u32 16, %s13
      %p131 = scmp.lt.s32.totalorder %s130, 31
      %s132 = scalar_select %p131, %s130, 31
      %s133 = smul.addr %s132, 8
      %s134 = scalar_lea.vmem %s2, %s133
      %s135 = smul.u32 16, %s13
      %p136 = scmp.lt.s32.totalorder %s135, 31
      %s137 = scalar_select %p136, %s135, 31
      %s138 = smul.addr %s137, 8
      %s139 = scalar_lea.vmem %s0, %s138
      %s140 = smul.u32 16, %s13
      %s141 = smul.u32 16, %s13
      %p142 = scmp.lt.s32.totalorder %s141, 31
      %s143 = scalar_select %p142, %s141, 31
      %s144 = smul.addr %s143, 8
      %s145 = scalar_lea.vmem %s2, %s144
      %s146 = smul.u32 16, %s13
      %v147 = vld [vmem:[%s139] sm:$0xff]
      %v148 = vld [vmem:[%s139 + $0x8] sm:$0xff]
      %v149 = vld [vmem:[%s139 + $0x10] sm:$0xff]
      %v150 = vld [vmem:[%s139 + $0x18] sm:$0xff]
      %v151 = vld [vmem:[%s139 + $0x20] sm:$0xff]
      %v152 = vld [vmem:[%s139 + $0x28] sm:$0xff]
      %v153 = vld [vmem:[%s139 + $0x30] sm:$0xff]
      %v154 = vld [vmem:[%s139 + $0x38] sm:$0xff]
      %v155 = vld [vmem:[%s139 + $0x40] sm:$0xff]
      %v156 = vld [vmem:[%s139 + $0x48] sm:$0xff]
      %v157 = vld [vmem:[%s139 + $0x50] sm:$0xff]
      %v158 = vld [vmem:[%s139 + $0x58] sm:$0xff]
      %v159 = vld [vmem:[%s139 + $0x60] sm:$0xff]
      %v160 = vld [vmem:[%s139 + $0x68] sm:$0xff]
      %v161 = vld [vmem:[%s139 + $0x70] sm:$0xff]
      %v162 = vld [vmem:[%s139 + $0x78] sm:$0xff]
      %v163 = vld [vmem:[%s1] sm:$0xff]
      %v164 = vld [vmem:[%s1 + $0x8] sm:$0xff]
      %v165 = vld [vmem:[%s1 + $0x10] sm:$0xff]
      %v166 = vld [vmem:[%s1 + $0x18] sm:$0xff]
      %v167 = vld [vmem:[%s1 + $0x20] sm:$0xff]
      %v168 = vld [vmem:[%s1 + $0x28] sm:$0xff]
      %v169 = vld [vmem:[%s1 + $0x30] sm:$0xff]
      %v170 = vld [vmem:[%s1 + $0x38] sm:$0xff]
      %v171 = vld [vmem:[%s1 + $0x40] sm:$0xff]
      %v172 = vld [vmem:[%s1 + $0x48] sm:$0xff]
      %v173 = vld [vmem:[%s1 + $0x50] sm:$0xff]
      %v174 = vld [vmem:[%s1 + $0x58] sm:$0xff]
      %v175 = vld [vmem:[%s1 + $0x60] sm:$0xff]
      %v176 = vld [vmem:[%s1 + $0x68] sm:$0xff]
      %v177 = vld [vmem:[%s1 + $0x70] sm:$0xff]
      %v178 = vld [vmem:[%s1 + $0x78] sm:$0xff]
      %v179 = vld [vmem:[%s1 + $0x80] sm:$0xff]
      %v180 = vld [vmem:[%s1 + $0x88] sm:$0xff]
      %v181 = vld [vmem:[%s1 + $0x90] sm:$0xff]
      %v182 = vld [vmem:[%s1 + $0x98] sm:$0xff]
      %v183 = vld [vmem:[%s1 + $0xa0] sm:$0x1]
      %v184 = vld [vmem:[%s1 + $0xa3] sm:$0x1]
      %v185 = vld [vmem:[%s1 + $0xa6] sm:$0x1]
      %v186 = vlaneseq
      %v187 = vshrl.u32 %v186, 7
      %v188 = vsub.s32 0, %v187
      %v189 = vrot.slane %v183, %v188
      %vm190 = vcmask 261120
      %v192 = vsel %vm190, %v147, 0
      %v195 = vsel %vm190, %v148, 0
      %v198 = vsel %vm190, %v149, 0
      %v201 = vsel %vm190, %v150, 0
      %v204 = vsel %vm190, %v151, 0
      %v207 = vsel %vm190, %v152, 0
      %v210 = vsel %vm190, %v153, 0
      %v213 = vsel %vm190, %v154, 0
      %v216 = vsel %vm190, %v155, 0
      %v219 = vsel %vm190, %v156, 0
      %v222 = vsel %vm190, %v157, 0
      %v225 = vsel %vm190, %v158, 0
      %v228 = vsel %vm190, %v159, 0
      %v231 = vsel %vm190, %v160, 0
      %v234 = vsel %vm190, %v161, 0
      %v237 = vsel %vm190, %v162, 0
      %239 = vmatprep.subr.mxu0 0.0
      %240 = vmatpush1.msra.mxu0 0.0
      %241 = vmatprep.subr.mxu0 0.0
      %242 = vmatpush1.msra.mxu0 0.0
      %243 = vmatprep.subr.mxu0 0.0
      %244 = vmatpush1.msra.mxu0 0.0
      %245 = vmatprep.subr.mxu0 0.0
      %246 = vmatpush1.msra.mxu0 0.0
      %247 = vmatprep.subr.mxu0 0.0
      %248 = vmatpush1.msra.mxu0 0.0
      %249 = vmatprep.subr.mxu0 0.0
      %250 = vmatpush1.msra.mxu0 0.0
      %251 = vmatprep.subr.mxu0 0.0
      %252 = vmatpush1.msra.mxu0 0.0
      %253 = vmatprep.subr.mxu0 0.0
      %254 = vmatpush1.msra.mxu0 0.0
      %255 = vmatprep.subr.mxu0 0.0
      %256 = vmatpush1.msra.mxu0 0.0
      %257 = vmatprep.subr.mxu0 0.0
      %258 = vmatpush1.msra.mxu0 0.0
      %259 = vmatprep.subr.mxu0 0.0
      %260 = vmatpush1.msra.mxu0 0.0
      %261 = vmatprep.subr.mxu0 0.0
      %262 = vmatpush1.msra.mxu0 0.0
      %263 = vmatprep.subr.mxu0 0.0
      %264 = vmatpush1.msra.mxu0 %v166
      %265 = vmatprep.subr.mxu0 0.0
      %266 = vmatpush1.msra.mxu0 %v165
      %267 = vmatprep.subr.mxu0 0.0
      %268 = vmatpush1.msra.mxu0 %v164
      %269 = vmatprep.subr.mxu0 0.0
      %270 = vmatpush1.msra.mxu0 %v163
      %271 = vmatprep.subr.mxu0 0.0
      %272 = vmatpush2.msra.mxu0 0.0
      %273 = vmatprep.subr.mxu0 0.0
      %274 = vmatpush2.msra.mxu0 0.0
      %275 = vmatprep.subr.mxu0 0.0
      %276 = vmatpush2.msra.mxu0 0.0
      %277 = vmatprep.subr.mxu0 0.0
      %278 = vmatpush2.msra.mxu0 0.0
      %279 = vmatprep.subr.mxu0 0.0
      %280 = vmatpush2.msra.mxu0 0.0
      %281 = vmatprep.subr.mxu0 0.0
      %282 = vmatpush2.msra.mxu0 0.0
      %283 = vmatprep.subr.mxu0 0.0
      %284 = vmatpush2.msra.mxu0 0.0
      %285 = vmatprep.subr.mxu0 0.0
      %286 = vmatpush2.msra.mxu0 0.0
      %287 = vmatprep.subr.mxu0 0.0
      %288 = vmatpush2.msra.mxu0 0.0
      %289 = vmatprep.subr.mxu0 0.0
      %290 = vmatpush2.msra.mxu0 0.0
      %291 = vmatprep.subr.mxu0 0.0
      %292 = vmatpush2.msra.mxu0 0.0
      %293 = vmatprep.subr.mxu0 0.0
      %294 = vmatpush2.msra.mxu0 0.0
      %295 = vmatprep.subr.mxu0 0.0
      %296 = vmatpush2.msra.mxu0 0.0
      %297 = vmatprep.subr.mxu0 0.0
      %298 = vmatpush2.msra.mxu0 0.0
      %299 = vmatprep.subr.mxu0 0.0
      %300 = vmatpush2.msra.mxu0 0.0
      %301 = vmatprep.subr.mxu0 0.0
      %302 = vmatpush2.msra.mxu0 0.0
      %303 = vmatprep.mubr.f32.mxu0 0.0
      %304 = vmatmul.mubr.f32.gmra.mxu0 %v192
      %v305 = vpop.f32.mrf.mxu0
      %v306 = vadd.f32 %v189, %v305
      %v307 = vpop.f32.mrf.mxu0
      %308 = vmatprep.mubr.f32.mxu0 0.0
      %309 = vmatmul.mubr.f32.gmra.mxu0 %v195
      %v310 = vpop.f32.mrf.mxu0
      %v311 = vadd.f32 %v189, %v310
      %v312 = vpop.f32.mrf.mxu0
      %313 = vmatprep.mubr.f32.mxu0 0.0
      %314 = vmatmul.mubr.f32.gmra.mxu0 %v198
      %v315 = vpop.f32.mrf.mxu0
      %v316 = vadd.f32 %v189, %v315
      %v317 = vpop.f32.mrf.mxu0
      %318 = vmatprep.mubr.f32.mxu0 0.0
      %319 = vmatmul.mubr.f32.gmra.mxu0 %v201
      %v320 = vpop.f32.mrf.mxu0
      %v321 = vadd.f32 %v189, %v320
      %v322 = vpop.f32.mrf.mxu0
      %323 = vmatprep.mubr.f32.mxu0 0.0
      %324 = vmatmul.mubr.f32.gmra.mxu0 %v204
      %v325 = vpop.f32.mrf.mxu0
      %v326 = vadd.f32 %v189, %v325
      %v327 = vpop.f32.mrf.mxu0
      %328 = vmatprep.mubr.f32.mxu0 0.0
      %329 = vmatmul.mubr.f32.gmra.mxu0 %v207
      %v330 = vpop.f32.mrf.mxu0
      %v331 = vadd.f32 %v189, %v330
      %v332 = vpop.f32.mrf.mxu0
      %333 = vmatprep.mubr.f32.mxu0 0.0
      %334 = vmatmul.mubr.f32.gmra.mxu0 %v210
      %v335 = vpop.f32.mrf.mxu0
      %v336 = vadd.f32 %v189, %v335
      %v337 = vpop.f32.mrf.mxu0
      %338 = vmatprep.mubr.f32.mxu0 0.0
      %339 = vmatmul.mubr.f32.gmra.mxu0 %v213
      %v340 = vpop.f32.mrf.mxu0
      %v341 = vadd.f32 %v189, %v340
      %v342 = vpop.f32.mrf.mxu0
      %343 = vmatprep.mubr.f32.mxu0 0.0
      %344 = vmatmul.mubr.f32.gmra.mxu0 %v216
      %v345 = vpop.f32.mrf.mxu0
      %v346 = vadd.f32 %v189, %v345
      %v347 = vpop.f32.mrf.mxu0
      %348 = vmatprep.mubr.f32.mxu0 0.0
      %349 = vmatmul.mubr.f32.gmra.mxu0 %v219
      %v350 = vpop.f32.mrf.mxu0
      %v351 = vadd.f32 %v189, %v350
      %v352 = vpop.f32.mrf.mxu0
      %353 = vmatprep.mubr.f32.mxu0 0.0
      %354 = vmatmul.mubr.f32.gmra.mxu0 %v222
      %v355 = vpop.f32.mrf.mxu0
      %v356 = vadd.f32 %v189, %v355
      %v357 = vpop.f32.mrf.mxu0
      %358 = vmatprep.mubr.f32.mxu0 0.0
      %359 = vmatmul.mubr.f32.gmra.mxu0 %v225
      %v360 = vpop.f32.mrf.mxu0
      %v361 = vadd.f32 %v189, %v360
      %v362 = vpop.f32.mrf.mxu0
      %363 = vmatprep.mubr.f32.mxu0 0.0
      %364 = vmatmul.mubr.f32.gmra.mxu0 %v228
      %v365 = vpop.f32.mrf.mxu0
      %v366 = vadd.f32 %v189, %v365
      %v367 = vpop.f32.mrf.mxu0
      %368 = vmatprep.mubr.f32.mxu0 0.0
      %369 = vmatmul.mubr.f32.gmra.mxu0 %v231
      %v370 = vpop.f32.mrf.mxu0
      %v371 = vadd.f32 %v189, %v370
      %v372 = vpop.f32.mrf.mxu0
      %373 = vmatprep.mubr.f32.mxu0 0.0
      %374 = vmatmul.mubr.f32.gmra.mxu0 %v234
      %v375 = vpop.f32.mrf.mxu0
      %v376 = vadd.f32 %v189, %v375
      %v377 = vpop.f32.mrf.mxu0
      %378 = vmatprep.mubr.f32.mxu0 0.0
      %379 = vmatmul.mubr.f32.gmra.mxu0 %v237
      %v380 = vpop.f32.mrf.mxu0
      %v381 = vadd.f32 %v189, %v380
      %v382 = vpop.f32.mrf.mxu0
      %383 = vdwg.mxu0
      %v384 = vld [vmem:[%s1 + $0xa1] sm:$0x1]
      %v385 = vld [vmem:[%s1 + $0xa2] sm:$0x1]
      %vm386 = vcmask 523264
      %v387 = vsel %vm386, %v306, 0.0
      %388 = vadd.xlane.f32.xlu0 %v387
      %v389 = vpop.xlane.xlu0 %388
      %v390 = vsel %vm386, %v311, 0.0
      %391 = vadd.xlane.f32.xlu0 %v390
      %v392 = vpop.xlane.xlu0 %391
      %v393 = vsel %vm386, %v316, 0.0
      %394 = vadd.xlane.f32.xlu0 %v393
      %v395 = vpop.xlane.xlu0 %394
      %v396 = vsel %vm386, %v321, 0.0
      %397 = vadd.xlane.f32.xlu0 %v396
      %v398 = vpop.xlane.xlu0 %397
      %v399 = vsel %vm386, %v326, 0.0
      %400 = vadd.xlane.f32.xlu0 %v399
      %v401 = vpop.xlane.xlu0 %400
      %v402 = vsel %vm386, %v331, 0.0
      %403 = vadd.xlane.f32.xlu0 %v402
      %v404 = vpop.xlane.xlu0 %403
      %v405 = vsel %vm386, %v336, 0.0
      %406 = vadd.xlane.f32.xlu0 %v405
      %v407 = vpop.xlane.xlu0 %406
      %v408 = vsel %vm386, %v341, 0.0
      %409 = vadd.xlane.f32.xlu0 %v408
      %v410 = vpop.xlane.xlu0 %409
      %v411 = vsel %vm386, %v346, 0.0
      %412 = vadd.xlane.f32.xlu0 %v411
      %v413 = vpop.xlane.xlu0 %412
      %v414 = vsel %vm386, %v351, 0.0
      %415 = vadd.xlane.f32.xlu0 %v414
      %v416 = vpop.xlane.xlu0 %415
      %v417 = vsel %vm386, %v356, 0.0
      %418 = vadd.xlane.f32.xlu0 %v417
      %v419 = vpop.xlane.xlu0 %418
      %v420 = vsel %vm386, %v361, 0.0
      %421 = vadd.xlane.f32.xlu0 %v420
      %v422 = vpop.xlane.xlu0 %421
      %v423 = vsel %vm386, %v366, 0.0
      %424 = vadd.xlane.f32.xlu0 %v423
      %v425 = vpop.xlane.xlu0 %424
      %v426 = vsel %vm386, %v371, 0.0
      %427 = vadd.xlane.f32.xlu0 %v426
      %v428 = vpop.xlane.xlu0 %427
      %v429 = vsel %vm386, %v376, 0.0
      %430 = vadd.xlane.f32.xlu0 %v429
      %v431 = vpop.xlane.xlu0 %430
      %v432 = vsel %vm386, %v381, 0.0
      %433 = vadd.xlane.f32.xlu0 %v432
      %v434 = vpop.xlane.xlu0 %433
      %v435 = vrcp.pop 64.0
      %v436 = vmul.f32 %v389, %v435
      %v437 = vmul.f32 %v392, %v435
      %v438 = vmul.f32 %v395, %v435
      %v439 = vmul.f32 %v398, %v435
      %v440 = vmul.f32 %v401, %v435
      %v441 = vmul.f32 %v404, %v435
      %v442 = vmul.f32 %v407, %v435
      %v443 = vmul.f32 %v410, %v435
      %v444 = vmul.f32 %v413, %v435
      %v445 = vmul.f32 %v416, %v435
      %v446 = vmul.f32 %v419, %v435
      %v447 = vmul.f32 %v422, %v435
      %v448 = vmul.f32 %v425, %v435
      %v449 = vmul.f32 %v428, %v435
      %v450 = vmul.f32 %v431, %v435
      %v451 = vmul.f32 %v434, %v435
      %v452 = vsub.f32 %v306, %v436
      %v453 = vsub.f32 %v311, %v437
      %v454 = vsub.f32 %v316, %v438
      %v455 = vsub.f32 %v321, %v439
      %v456 = vsub.f32 %v326, %v440
      %v457 = vsub.f32 %v331, %v441
      %v458 = vsub.f32 %v336, %v442
      %v459 = vsub.f32 %v341, %v443
      %v460 = vsub.f32 %v346, %v444
      %v461 = vsub.f32 %v351, %v445
      %v462 = vsub.f32 %v356, %v446
      %v463 = vsub.f32 %v361, %v447
      %v464 = vsub.f32 %v366, %v448
      %v465 = vsub.f32 %v371, %v449
      %v466 = vsub.f32 %v376, %v450
      %v467 = vsub.f32 %v381, %v451
      %v468 = vmul.f32 %v452, %v452
      %v469 = vmul.f32 %v453, %v453
      %v470 = vmul.f32 %v454, %v454
      %v471 = vmul.f32 %v455, %v455
      %v472 = vmul.f32 %v456, %v456
      %v473 = vmul.f32 %v457, %v457
      %v474 = vmul.f32 %v458, %v458
      %v475 = vmul.f32 %v459, %v459
      %v476 = vmul.f32 %v460, %v460
      %v477 = vmul.f32 %v461, %v461
      %v478 = vmul.f32 %v462, %v462
      %v479 = vmul.f32 %v463, %v463
      %v480 = vmul.f32 %v464, %v464
      %v481 = vmul.f32 %v465, %v465
      %v482 = vmul.f32 %v466, %v466
      %v483 = vmul.f32 %v467, %v467
      %v484 = vsel %vm386, %v468, 0.0
      %485 = vadd.xlane.f32.xlu0 %v484
      %v486 = vpop.xlane.xlu0 %485
      %v487 = vsel %vm386, %v469, 0.0
      %488 = vadd.xlane.f32.xlu0 %v487
      %v489 = vpop.xlane.xlu0 %488
      %v490 = vsel %vm386, %v470, 0.0
      %491 = vadd.xlane.f32.xlu0 %v490
      %v492 = vpop.xlane.xlu0 %491
      %v493 = vsel %vm386, %v471, 0.0
      %494 = vadd.xlane.f32.xlu0 %v493
      %v495 = vpop.xlane.xlu0 %494
      %v496 = vsel %vm386, %v472, 0.0
      %497 = vadd.xlane.f32.xlu0 %v496
      %v498 = vpop.xlane.xlu0 %497
      %v499 = vsel %vm386, %v473, 0.0
      %500 = vadd.xlane.f32.xlu0 %v499
      %v501 = vpop.xlane.xlu0 %500
      %v502 = vsel %vm386, %v474, 0.0
      %503 = vadd.xlane.f32.xlu0 %v502
      %v504 = vpop.xlane.xlu0 %503
      %v505 = vsel %vm386, %v475, 0.0
      %506 = vadd.xlane.f32.xlu0 %v505
      %v507 = vpop.xlane.xlu0 %506
      %v508 = vsel %vm386, %v476, 0.0
      %509 = vadd.xlane.f32.xlu0 %v508
      %v510 = vpop.xlane.xlu0 %509
      %v511 = vsel %vm386, %v477, 0.0
      %512 = vadd.xlane.f32.xlu0 %v511
      %v513 = vpop.xlane.xlu0 %512
      %v514 = vsel %vm386, %v478, 0.0
      %515 = vadd.xlane.f32.xlu0 %v514
      %v516 = vpop.xlane.xlu0 %515
      %v517 = vsel %vm386, %v479, 0.0
      %518 = vadd.xlane.f32.xlu0 %v517
      %v519 = vpop.xlane.xlu0 %518
      %v520 = vsel %vm386, %v480, 0.0
      %521 = vadd.xlane.f32.xlu0 %v520
      %v522 = vpop.xlane.xlu0 %521
      %v523 = vsel %vm386, %v481, 0.0
      %524 = vadd.xlane.f32.xlu0 %v523
      %v525 = vpop.xlane.xlu0 %524
      %v526 = vsel %vm386, %v482, 0.0
      %527 = vadd.xlane.f32.xlu0 %v526
      %v528 = vpop.xlane.xlu0 %527
      %v529 = vsel %vm386, %v483, 0.0
      %530 = vadd.xlane.f32.xlu0 %v529
      %v531 = vpop.xlane.xlu0 %530
      %v532 = vmul.f32 %v486, 0.015873017
      %v533 = vmul.f32 %v489, 0.015873017
      %v534 = vmul.f32 %v492, 0.015873017
      %v535 = vmul.f32 %v495, 0.015873017
      %v536 = vmul.f32 %v498, 0.015873017
      %v537 = vmul.f32 %v501, 0.015873017
      %v538 = vmul.f32 %v504, 0.015873017
      %v539 = vmul.f32 %v507, 0.015873017
      %v540 = vmul.f32 %v510, 0.015873017
      %v541 = vmul.f32 %v513, 0.015873017
      %v542 = vmul.f32 %v516, 0.015873017
      %v543 = vmul.f32 %v519, 0.015873017
      %v544 = vmul.f32 %v522, 0.015873017
      %v545 = vmul.f32 %v525, 0.015873017
      %v546 = vmul.f32 %v528, 0.015873017
      %v547 = vmul.f32 %v531, 0.015873017
      %v548 = vrsqrt.pop %v532
      %v549 = vmul.f32 %v532, %v548
      %vm550 = vcmp.eq.f32.partialorder %v532, inf
      %v551 = vsel %vm550, %v532, %v549
      %vm552 = vcmp.eq.f32.partialorder %v532, 0.0
      %v553 = vand.u32 %v532, 2147483648
      %v554 = vsel %vm552, %v553, %v551
      %v555 = vrsqrt.pop %v533
      %v556 = vmul.f32 %v533, %v555
      %vm557 = vcmp.eq.f32.partialorder %v533, inf
      %v558 = vsel %vm557, %v533, %v556
      %vm559 = vcmp.eq.f32.partialorder %v533, 0.0
      %v560 = vand.u32 %v533, 2147483648
      %v561 = vsel %vm559, %v560, %v558
      %v562 = vrsqrt.pop %v534
      %v563 = vmul.f32 %v534, %v562
      %vm564 = vcmp.eq.f32.partialorder %v534, inf
      %v565 = vsel %vm564, %v534, %v563
      %vm566 = vcmp.eq.f32.partialorder %v534, 0.0
      %v567 = vand.u32 %v534, 2147483648
      %v568 = vsel %vm566, %v567, %v565
      %v569 = vrsqrt.pop %v535
      %v570 = vmul.f32 %v535, %v569
      %vm571 = vcmp.eq.f32.partialorder %v535, inf
      %v572 = vsel %vm571, %v535, %v570
      %vm573 = vcmp.eq.f32.partialorder %v535, 0.0
      %v574 = vand.u32 %v535, 2147483648
      %v575 = vsel %vm573, %v574, %v572
      %v576 = vrsqrt.pop %v536
      %v577 = vmul.f32 %v536, %v576
      %vm578 = vcmp.eq.f32.partialorder %v536, inf
      %v579 = vsel %vm578, %v536, %v577
      %vm580 = vcmp.eq.f32.partialorder %v536, 0.0
      %v581 = vand.u32 %v536, 2147483648
      %v582 = vsel %vm580, %v581, %v579
      %v583 = vrsqrt.pop %v537
      %v584 = vmul.f32 %v537, %v583
      %vm585 = vcmp.eq.f32.partialorder %v537, inf
      %v586 = vsel %vm585, %v537, %v584
      %vm587 = vcmp.eq.f32.partialorder %v537, 0.0
      %v588 = vand.u32 %v537, 2147483648
      %v589 = vsel %vm587, %v588, %v586
      %v590 = vrsqrt.pop %v538
      %v591 = vmul.f32 %v538, %v590
      %vm592 = vcmp.eq.f32.partialorder %v538, inf
      %v593 = vsel %vm592, %v538, %v591
      %vm594 = vcmp.eq.f32.partialorder %v538, 0.0
      %v595 = vand.u32 %v538, 2147483648
      %v596 = vsel %vm594, %v595, %v593
      %v597 = vrsqrt.pop %v539
      %v598 = vmul.f32 %v539, %v597
      %vm599 = vcmp.eq.f32.partialorder %v539, inf
      %v600 = vsel %vm599, %v539, %v598
      %vm601 = vcmp.eq.f32.partialorder %v539, 0.0
      %v602 = vand.u32 %v539, 2147483648
      %v603 = vsel %vm601, %v602, %v600
      %v604 = vrsqrt.pop %v540
      %v605 = vmul.f32 %v540, %v604
      %vm606 = vcmp.eq.f32.partialorder %v540, inf
      %v607 = vsel %vm606, %v540, %v605
      %vm608 = vcmp.eq.f32.partialorder %v540, 0.0
      %v609 = vand.u32 %v540, 2147483648
      %v610 = vsel %vm608, %v609, %v607
      %v611 = vrsqrt.pop %v541
      %v612 = vmul.f32 %v541, %v611
      %vm613 = vcmp.eq.f32.partialorder %v541, inf
      %v614 = vsel %vm613, %v541, %v612
      %vm615 = vcmp.eq.f32.partialorder %v541, 0.0
      %v616 = vand.u32 %v541, 2147483648
      %v617 = vsel %vm615, %v616, %v614
      %v618 = vrsqrt.pop %v542
      %v619 = vmul.f32 %v542, %v618
      %vm620 = vcmp.eq.f32.partialorder %v542, inf
      %v621 = vsel %vm620, %v542, %v619
      %vm622 = vcmp.eq.f32.partialorder %v542, 0.0
      %v623 = vand.u32 %v542, 2147483648
      %v624 = vsel %vm622, %v623, %v621
      %v625 = vrsqrt.pop %v543
      %v626 = vmul.f32 %v543, %v625
      %vm627 = vcmp.eq.f32.partialorder %v543, inf
      %v628 = vsel %vm627, %v543, %v626
      %vm629 = vcmp.eq.f32.partialorder %v543, 0.0
      %v630 = vand.u32 %v543, 2147483648
      %v631 = vsel %vm629, %v630, %v628
      %v632 = vrsqrt.pop %v544
      %v633 = vmul.f32 %v544, %v632
      %vm634 = vcmp.eq.f32.partialorder %v544, inf
      %v635 = vsel %vm634, %v544, %v633
      %vm636 = vcmp.eq.f32.partialorder %v544, 0.0
      %v637 = vand.u32 %v544, 2147483648
      %v638 = vsel %vm636, %v637, %v635
      %v639 = vrsqrt.pop %v545
      %v640 = vmul.f32 %v545, %v639
      %vm641 = vcmp.eq.f32.partialorder %v545, inf
      %v642 = vsel %vm641, %v545, %v640
      %vm643 = vcmp.eq.f32.partialorder %v545, 0.0
      %v644 = vand.u32 %v545, 2147483648
      %v645 = vsel %vm643, %v644, %v642
      %v646 = vrsqrt.pop %v546
      %v647 = vmul.f32 %v546, %v646
      %vm648 = vcmp.eq.f32.partialorder %v546, inf
      %v649 = vsel %vm648, %v546, %v647
      %vm650 = vcmp.eq.f32.partialorder %v546, 0.0
      %v651 = vand.u32 %v546, 2147483648
      %v652 = vsel %vm650, %v651, %v649
      %v653 = vrsqrt.pop %v547
      %v654 = vmul.f32 %v547, %v653
      %vm655 = vcmp.eq.f32.partialorder %v547, inf
      %v656 = vsel %vm655, %v547, %v654
      %vm657 = vcmp.eq.f32.partialorder %v547, 0.0
      %v658 = vand.u32 %v547, 2147483648
      %v659 = vsel %vm657, %v658, %v656
      %v660 = vadd.f32 %v554, 1e-06
      %v661 = vadd.f32 %v561, 1e-06
      %v662 = vadd.f32 %v568, 1e-06
      %v663 = vadd.f32 %v575, 1e-06
      %v664 = vadd.f32 %v582, 1e-06
      %v665 = vadd.f32 %v589, 1e-06
      %v666 = vadd.f32 %v596, 1e-06
      %v667 = vadd.f32 %v603, 1e-06
      %v668 = vadd.f32 %v610, 1e-06
      %v669 = vadd.f32 %v617, 1e-06
      %v670 = vadd.f32 %v624, 1e-06
      %v671 = vadd.f32 %v631, 1e-06
      %v672 = vadd.f32 %v638, 1e-06
      %v673 = vadd.f32 %v645, 1e-06
      %v674 = vadd.f32 %v652, 1e-06
      %v675 = vadd.f32 %v659, 1e-06
      %v676 = vrcp.pop %v660
      %v677 = vrcp.pop %v661
      %v678 = vrcp.pop %v662
      %v679 = vrcp.pop %v663
      %v680 = vrcp.pop %v664
      %v681 = vrcp.pop %v665
      %v682 = vrcp.pop %v666
      %v683 = vrcp.pop %v667
      %v684 = vrcp.pop %v668
      %v685 = vrcp.pop %v669
      %v686 = vrcp.pop %v670
      %v687 = vrcp.pop %v671
      %v688 = vrcp.pop %v672
      %v689 = vrcp.pop %v673
      %v690 = vrcp.pop %v674
      %v691 = vrcp.pop %v675
      %v692 = vlaneseq
      %v693 = vshrl.u32 %v692, 7
      %v694 = vsub.s32 0, %v693
      %v695 = vrot.slane %v384, %v694
      %v696 = vmul.f32 %v695, %v452
      %v697 = vmul.f32 %v695, %v453
      %v698 = vmul.f32 %v695, %v454
      %v699 = vmul.f32 %v695, %v455
      %v700 = vmul.f32 %v695, %v456
      %v701 = vmul.f32 %v695, %v457
      %v702 = vmul.f32 %v695, %v458
      %v703 = vmul.f32 %v695, %v459
      %v704 = vmul.f32 %v695, %v460
      %v705 = vmul.f32 %v695, %v461
      %v706 = vmul.f32 %v695, %v462
      %v707 = vmul.f32 %v695, %v463
      %v708 = vmul.f32 %v695, %v464
      %v709 = vmul.f32 %v695, %v465
      %v710 = vmul.f32 %v695, %v466
      %v711 = vmul.f32 %v695, %v467
      %v712 = vmul.f32 %v696, %v676
      %v713 = vmul.f32 %v697, %v677
      %v714 = vmul.f32 %v698, %v678
      %v715 = vmul.f32 %v699, %v679
      %v716 = vmul.f32 %v700, %v680
      %v717 = vmul.f32 %v701, %v681
      %v718 = vmul.f32 %v702, %v682
      %v719 = vmul.f32 %v703, %v683
      %v720 = vmul.f32 %v704, %v684
      %v721 = vmul.f32 %v705, %v685
      %v722 = vmul.f32 %v706, %v686
      %v723 = vmul.f32 %v707, %v687
      %v724 = vmul.f32 %v708, %v688
      %v725 = vmul.f32 %v709, %v689
      %v726 = vmul.f32 %v710, %v690
      %v727 = vmul.f32 %v711, %v691
      %v728 = vlaneseq
      %v729 = vshrl.u32 %v728, 7
      %v730 = vsub.s32 0, %v729
      %v731 = vrot.slane %v385, %v730
      %v732 = vadd.f32 %v712, %v731
      %v733 = vadd.f32 %v713, %v731
      %v734 = vadd.f32 %v714, %v731
      %v735 = vadd.f32 %v715, %v731
      %v736 = vadd.f32 %v716, %v731
      %v737 = vadd.f32 %v717, %v731
      %v738 = vadd.f32 %v718, %v731
      %v739 = vadd.f32 %v719, %v731
      %v740 = vadd.f32 %v720, %v731
      %v741 = vadd.f32 %v721, %v731
      %v742 = vadd.f32 %v722, %v731
      %v743 = vadd.f32 %v723, %v731
      %v744 = vadd.f32 %v724, %v731
      %v745 = vadd.f32 %v725, %v731
      %v746 = vadd.f32 %v726, %v731
      %v747 = vadd.f32 %v727, %v731
      %v748 = vtanh.pop %v732
      %v749 = vtanh.pop %v733
      %v750 = vtanh.pop %v734
      %v751 = vtanh.pop %v735
      %v752 = vtanh.pop %v736
      %v753 = vtanh.pop %v737
      %v754 = vtanh.pop %v738
      %v755 = vtanh.pop %v739
      %v756 = vtanh.pop %v740
      %v757 = vtanh.pop %v741
      %v758 = vtanh.pop %v742
      %v759 = vtanh.pop %v743
      %v760 = vtanh.pop %v744
      %v761 = vtanh.pop %v745
      %v762 = vtanh.pop %v746
      %v763 = vtanh.pop %v747
      %v764 = vlaneseq
      %v765 = vshrl.u32 %v764, 7
      %v766 = vsub.s32 0, %v765
      %v767 = vrot.slane %v184, %v766
      %v769 = vsel %vm386, %v748, 0
      %v772 = vsel %vm386, %v749, 0
      %v775 = vsel %vm386, %v750, 0
      %v778 = vsel %vm386, %v751, 0
      %v781 = vsel %vm386, %v752, 0
      %v784 = vsel %vm386, %v753, 0
      %v787 = vsel %vm386, %v754, 0
      %v790 = vsel %vm386, %v755, 0
      %v793 = vsel %vm386, %v756, 0
      %v796 = vsel %vm386, %v757, 0
      %v799 = vsel %vm386, %v758, 0
      %v802 = vsel %vm386, %v759, 0
      %v805 = vsel %vm386, %v760, 0
      %v808 = vsel %vm386, %v761, 0
      %v811 = vsel %vm386, %v762, 0
      %v814 = vsel %vm386, %v763, 0
      %816 = vmatprep.subr.mxu0 0.0
      %817 = vmatpush1.msra.mxu0 0.0
      %818 = vmatprep.subr.mxu0 0.0
      %819 = vmatpush1.msra.mxu0 0.0
      %820 = vmatprep.subr.mxu0 0.0
      %821 = vmatpush1.msra.mxu0 0.0
      %822 = vmatprep.subr.mxu0 0.0
      %823 = vmatpush1.msra.mxu0 0.0
      %824 = vmatprep.subr.mxu0 0.0
      %825 = vmatpush1.msra.mxu0 0.0
      %826 = vmatprep.subr.mxu0 0.0
      %827 = vmatpush1.msra.mxu0 0.0
      %828 = vmatprep.subr.mxu0 0.0
      %829 = vmatpush1.msra.mxu0 0.0
      %830 = vmatprep.subr.mxu0 0.0
      %831 = vmatpush1.msra.mxu0 0.0
      %832 = vmatprep.subr.mxu0 0.0
      %833 = vmatpush1.msra.mxu0 %v174
      %834 = vmatprep.subr.mxu0 0.0
      %835 = vmatpush1.msra.mxu0 %v173
      %836 = vmatprep.subr.mxu0 0.0
      %837 = vmatpush1.msra.mxu0 %v172
      %838 = vmatprep.subr.mxu0 0.0
      %839 = vmatpush1.msra.mxu0 %v171
      %840 = vmatprep.subr.mxu0 0.0
      %841 = vmatpush1.msra.mxu0 %v170
      %842 = vmatprep.subr.mxu0 0.0
      %843 = vmatpush1.msra.mxu0 %v169
      %844 = vmatprep.subr.mxu0 0.0
      %845 = vmatpush1.msra.mxu0 %v168
      %846 = vmatprep.subr.mxu0 0.0
      %847 = vmatpush1.msra.mxu0 %v167
      %848 = vmatprep.subr.mxu0 0.0
      %849 = vmatpush2.msra.mxu0 0.0
      %850 = vmatprep.subr.mxu0 0.0
      %851 = vmatpush2.msra.mxu0 0.0
      %852 = vmatprep.subr.mxu0 0.0
      %853 = vmatpush2.msra.mxu0 0.0
      %854 = vmatprep.subr.mxu0 0.0
      %855 = vmatpush2.msra.mxu0 0.0
      %856 = vmatprep.subr.mxu0 0.0
      %857 = vmatpush2.msra.mxu0 0.0
      %858 = vmatprep.subr.mxu0 0.0
      %859 = vmatpush2.msra.mxu0 0.0
      %860 = vmatprep.subr.mxu0 0.0
      %861 = vmatpush2.msra.mxu0 0.0
      %862 = vmatprep.subr.mxu0 0.0
      %863 = vmatpush2.msra.mxu0 0.0
      %864 = vmatprep.subr.mxu0 0.0
      %865 = vmatpush2.msra.mxu0 0.0
      %866 = vmatprep.subr.mxu0 0.0
      %867 = vmatpush2.msra.mxu0 0.0
      %868 = vmatprep.subr.mxu0 0.0
      %869 = vmatpush2.msra.mxu0 0.0
      %870 = vmatprep.subr.mxu0 0.0
      %871 = vmatpush2.msra.mxu0 0.0
      %872 = vmatprep.subr.mxu0 0.0
      %873 = vmatpush2.msra.mxu0 0.0
      %874 = vmatprep.subr.mxu0 0.0
      %875 = vmatpush2.msra.mxu0 0.0
      %876 = vmatprep.subr.mxu0 0.0
      %877 = vmatpush2.msra.mxu0 0.0
      %878 = vmatprep.subr.mxu0 0.0
      %879 = vmatpush2.msra.mxu0 0.0
      %880 = vmatprep.mubr.f32.mxu0 0.0
      %881 = vmatmul.mubr.f32.gmra.mxu0 %v769
      %v882 = vpop.f32.mrf.mxu0
      %v883 = vadd.f32 %v767, %v882
      %v884 = vpop.f32.mrf.mxu0
      %885 = vmatprep.mubr.f32.mxu0 0.0
      %886 = vmatmul.mubr.f32.gmra.mxu0 %v772
      %v887 = vpop.f32.mrf.mxu0
      %v888 = vadd.f32 %v767, %v887
      %v889 = vpop.f32.mrf.mxu0
      %890 = vmatprep.mubr.f32.mxu0 0.0
      %891 = vmatmul.mubr.f32.gmra.mxu0 %v775
      %v892 = vpop.f32.mrf.mxu0
      %v893 = vadd.f32 %v767, %v892
      %v894 = vpop.f32.mrf.mxu0
      %895 = vmatprep.mubr.f32.mxu0 0.0
      %896 = vmatmul.mubr.f32.gmra.mxu0 %v778
      %v897 = vpop.f32.mrf.mxu0
      %v898 = vadd.f32 %v767, %v897
      %v899 = vpop.f32.mrf.mxu0
      %900 = vmatprep.mubr.f32.mxu0 0.0
      %901 = vmatmul.mubr.f32.gmra.mxu0 %v781
      %v902 = vpop.f32.mrf.mxu0
      %v903 = vadd.f32 %v767, %v902
      %v904 = vpop.f32.mrf.mxu0
      %905 = vmatprep.mubr.f32.mxu0 0.0
      %906 = vmatmul.mubr.f32.gmra.mxu0 %v784
      %v907 = vpop.f32.mrf.mxu0
      %v908 = vadd.f32 %v767, %v907
      %v909 = vpop.f32.mrf.mxu0
      %910 = vmatprep.mubr.f32.mxu0 0.0
      %911 = vmatmul.mubr.f32.gmra.mxu0 %v787
      %v912 = vpop.f32.mrf.mxu0
      %v913 = vadd.f32 %v767, %v912
      %v914 = vpop.f32.mrf.mxu0
      %915 = vmatprep.mubr.f32.mxu0 0.0
      %916 = vmatmul.mubr.f32.gmra.mxu0 %v790
      %v917 = vpop.f32.mrf.mxu0
      %v918 = vadd.f32 %v767, %v917
      %v919 = vpop.f32.mrf.mxu0
      %920 = vmatprep.mubr.f32.mxu0 0.0
      %921 = vmatmul.mubr.f32.gmra.mxu0 %v793
      %v922 = vpop.f32.mrf.mxu0
      %v923 = vadd.f32 %v767, %v922
      %v924 = vpop.f32.mrf.mxu0
      %925 = vmatprep.mubr.f32.mxu0 0.0
      %926 = vmatmul.mubr.f32.gmra.mxu0 %v796
      %v927 = vpop.f32.mrf.mxu0
      %v928 = vadd.f32 %v767, %v927
      %v929 = vpop.f32.mrf.mxu0
      %930 = vmatprep.mubr.f32.mxu0 0.0
      %931 = vmatmul.mubr.f32.gmra.mxu0 %v799
      %v932 = vpop.f32.mrf.mxu0
      %v933 = vadd.f32 %v767, %v932
      %v934 = vpop.f32.mrf.mxu0
      %935 = vmatprep.mubr.f32.mxu0 0.0
      %936 = vmatmul.mubr.f32.gmra.mxu0 %v802
      %v937 = vpop.f32.mrf.mxu0
      %v938 = vadd.f32 %v767, %v937
      %v939 = vpop.f32.mrf.mxu0
      %940 = vmatprep.mubr.f32.mxu0 0.0
      %941 = vmatmul.mubr.f32.gmra.mxu0 %v805
      %v942 = vpop.f32.mrf.mxu0
      %v943 = vadd.f32 %v767, %v942
      %v944 = vpop.f32.mrf.mxu0
      %945 = vmatprep.mubr.f32.mxu0 0.0
      %946 = vmatmul.mubr.f32.gmra.mxu0 %v808
      %v947 = vpop.f32.mrf.mxu0
      %v948 = vadd.f32 %v767, %v947
      %v949 = vpop.f32.mrf.mxu0
      %950 = vmatprep.mubr.f32.mxu0 0.0
      %951 = vmatmul.mubr.f32.gmra.mxu0 %v811
      %v952 = vpop.f32.mrf.mxu0
      %v953 = vadd.f32 %v767, %v952
      %v954 = vpop.f32.mrf.mxu0
      %955 = vmatprep.mubr.f32.mxu0 0.0
      %956 = vmatmul.mubr.f32.gmra.mxu0 %v814
      %v957 = vpop.f32.mrf.mxu0
      %v958 = vadd.f32 %v767, %v957
      %v959 = vpop.f32.mrf.mxu0
      %960 = vdwg.mxu0
      %v961 = vld [vmem:[%s1 + $0xa4] sm:$0x1]
      %v962 = vld [vmem:[%s1 + $0xa5] sm:$0x1]
      %v963 = vsel %vm386, %v883, 0.0
      %964 = vadd.xlane.f32.xlu0 %v963
      %v965 = vpop.xlane.xlu0 %964
      %v966 = vsel %vm386, %v888, 0.0
      %967 = vadd.xlane.f32.xlu0 %v966
      %v968 = vpop.xlane.xlu0 %967
      %v969 = vsel %vm386, %v893, 0.0
      %970 = vadd.xlane.f32.xlu0 %v969
      %v971 = vpop.xlane.xlu0 %970
      %v972 = vsel %vm386, %v898, 0.0
      %973 = vadd.xlane.f32.xlu0 %v972
      %v974 = vpop.xlane.xlu0 %973
      %v975 = vsel %vm386, %v903, 0.0
      %976 = vadd.xlane.f32.xlu0 %v975
      %v977 = vpop.xlane.xlu0 %976
      %v978 = vsel %vm386, %v908, 0.0
      %979 = vadd.xlane.f32.xlu0 %v978
      %v980 = vpop.xlane.xlu0 %979
      %v981 = vsel %vm386, %v913, 0.0
      %982 = vadd.xlane.f32.xlu0 %v981
      %v983 = vpop.xlane.xlu0 %982
      %v984 = vsel %vm386, %v918, 0.0
      %985 = vadd.xlane.f32.xlu0 %v984
      %v986 = vpop.xlane.xlu0 %985
      %v987 = vsel %vm386, %v923, 0.0
      %988 = vadd.xlane.f32.xlu0 %v987
      %v989 = vpop.xlane.xlu0 %988
      %v990 = vsel %vm386, %v928, 0.0
      %991 = vadd.xlane.f32.xlu0 %v990
      %v992 = vpop.xlane.xlu0 %991
      %v993 = vsel %vm386, %v933, 0.0
      %994 = vadd.xlane.f32.xlu0 %v993
      %v995 = vpop.xlane.xlu0 %994
      %v996 = vsel %vm386, %v938, 0.0
      %997 = vadd.xlane.f32.xlu0 %v996
      %v998 = vpop.xlane.xlu0 %997
      %v999 = vsel %vm386, %v943, 0.0
      %1000 = vadd.xlane.f32.xlu0 %v999
      %v1001 = vpop.xlane.xlu0 %1000
      %v1002 = vsel %vm386, %v948, 0.0
      %1003 = vadd.xlane.f32.xlu0 %v1002
      %v1004 = vpop.xlane.xlu0 %1003
      %v1005 = vsel %vm386, %v953, 0.0
      %1006 = vadd.xlane.f32.xlu0 %v1005
      %v1007 = vpop.xlane.xlu0 %1006
      %v1008 = vsel %vm386, %v958, 0.0
      %1009 = vadd.xlane.f32.xlu0 %v1008
      %v1010 = vpop.xlane.xlu0 %1009
      %v1011 = vmul.f32 %v965, %v435
      %v1012 = vmul.f32 %v968, %v435
      %v1013 = vmul.f32 %v971, %v435
      %v1014 = vmul.f32 %v974, %v435
      %v1015 = vmul.f32 %v977, %v435
      %v1016 = vmul.f32 %v980, %v435
      %v1017 = vmul.f32 %v983, %v435
      %v1018 = vmul.f32 %v986, %v435
      %v1019 = vmul.f32 %v989, %v435
      %v1020 = vmul.f32 %v992, %v435
      %v1021 = vmul.f32 %v995, %v435
      %v1022 = vmul.f32 %v998, %v435
      %v1023 = vmul.f32 %v1001, %v435
      %v1024 = vmul.f32 %v1004, %v435
      %v1025 = vmul.f32 %v1007, %v435
      %v1026 = vmul.f32 %v1010, %v435
      %v1027 = vsub.f32 %v883, %v1011
      %v1028 = vsub.f32 %v888, %v1012
      %v1029 = vsub.f32 %v893, %v1013
      %v1030 = vsub.f32 %v898, %v1014
      %v1031 = vsub.f32 %v903, %v1015
      %v1032 = vsub.f32 %v908, %v1016
      %v1033 = vsub.f32 %v913, %v1017
      %v1034 = vsub.f32 %v918, %v1018
      %v1035 = vsub.f32 %v923, %v1019
      %v1036 = vsub.f32 %v928, %v1020
      %v1037 = vsub.f32 %v933, %v1021
      %v1038 = vsub.f32 %v938, %v1022
      %v1039 = vsub.f32 %v943, %v1023
      %v1040 = vsub.f32 %v948, %v1024
      %v1041 = vsub.f32 %v953, %v1025
      %v1042 = vsub.f32 %v958, %v1026
      %v1043 = vmul.f32 %v1027, %v1027
      %v1044 = vmul.f32 %v1028, %v1028
      %v1045 = vmul.f32 %v1029, %v1029
      %v1046 = vmul.f32 %v1030, %v1030
      %v1047 = vmul.f32 %v1031, %v1031
      %v1048 = vmul.f32 %v1032, %v1032
      %v1049 = vmul.f32 %v1033, %v1033
      %v1050 = vmul.f32 %v1034, %v1034
      %v1051 = vmul.f32 %v1035, %v1035
      %v1052 = vmul.f32 %v1036, %v1036
      %v1053 = vmul.f32 %v1037, %v1037
      %v1054 = vmul.f32 %v1038, %v1038
      %v1055 = vmul.f32 %v1039, %v1039
      %v1056 = vmul.f32 %v1040, %v1040
      %v1057 = vmul.f32 %v1041, %v1041
      %v1058 = vmul.f32 %v1042, %v1042
      %v1059 = vsel %vm386, %v1043, 0.0
      %1060 = vadd.xlane.f32.xlu0 %v1059
      %v1061 = vpop.xlane.xlu0 %1060
      %v1062 = vsel %vm386, %v1044, 0.0
      %1063 = vadd.xlane.f32.xlu0 %v1062
      %v1064 = vpop.xlane.xlu0 %1063
      %v1065 = vsel %vm386, %v1045, 0.0
      %1066 = vadd.xlane.f32.xlu0 %v1065
      %v1067 = vpop.xlane.xlu0 %1066
      %v1068 = vsel %vm386, %v1046, 0.0
      %1069 = vadd.xlane.f32.xlu0 %v1068
      %v1070 = vpop.xlane.xlu0 %1069
      %v1071 = vsel %vm386, %v1047, 0.0
      %1072 = vadd.xlane.f32.xlu0 %v1071
      %v1073 = vpop.xlane.xlu0 %1072
      %v1074 = vsel %vm386, %v1048, 0.0
      %1075 = vadd.xlane.f32.xlu0 %v1074
      %v1076 = vpop.xlane.xlu0 %1075
      %v1077 = vsel %vm386, %v1049, 0.0
      %1078 = vadd.xlane.f32.xlu0 %v1077
      %v1079 = vpop.xlane.xlu0 %1078
      %v1080 = vsel %vm386, %v1050, 0.0
      %1081 = vadd.xlane.f32.xlu0 %v1080
      %v1082 = vpop.xlane.xlu0 %1081
      %v1083 = vsel %vm386, %v1051, 0.0
      %1084 = vadd.xlane.f32.xlu0 %v1083
      %v1085 = vpop.xlane.xlu0 %1084
      %v1086 = vsel %vm386, %v1052, 0.0
      %1087 = vadd.xlane.f32.xlu0 %v1086
      %v1088 = vpop.xlane.xlu0 %1087
      %v1089 = vsel %vm386, %v1053, 0.0
      %1090 = vadd.xlane.f32.xlu0 %v1089
      %v1091 = vpop.xlane.xlu0 %1090
      %v1092 = vsel %vm386, %v1054, 0.0
      %1093 = vadd.xlane.f32.xlu0 %v1092
      %v1094 = vpop.xlane.xlu0 %1093
      %v1095 = vsel %vm386, %v1055, 0.0
      %1096 = vadd.xlane.f32.xlu0 %v1095
      %v1097 = vpop.xlane.xlu0 %1096
      %v1098 = vsel %vm386, %v1056, 0.0
      %1099 = vadd.xlane.f32.xlu0 %v1098
      %v1100 = vpop.xlane.xlu0 %1099
      %v1101 = vsel %vm386, %v1057, 0.0
      %1102 = vadd.xlane.f32.xlu0 %v1101
      %v1103 = vpop.xlane.xlu0 %1102
      %v1104 = vsel %vm386, %v1058, 0.0
      %1105 = vadd.xlane.f32.xlu0 %v1104
      %v1106 = vpop.xlane.xlu0 %1105
      %v1107 = vmul.f32 %v1061, 0.015873017
      %v1108 = vmul.f32 %v1064, 0.015873017
      %v1109 = vmul.f32 %v1067, 0.015873017
      %v1110 = vmul.f32 %v1070, 0.015873017
      %v1111 = vmul.f32 %v1073, 0.015873017
      %v1112 = vmul.f32 %v1076, 0.015873017
      %v1113 = vmul.f32 %v1079, 0.015873017
      %v1114 = vmul.f32 %v1082, 0.015873017
      %v1115 = vmul.f32 %v1085, 0.015873017
      %v1116 = vmul.f32 %v1088, 0.015873017
      %v1117 = vmul.f32 %v1091, 0.015873017
      %v1118 = vmul.f32 %v1094, 0.015873017
      %v1119 = vmul.f32 %v1097, 0.015873017
      %v1120 = vmul.f32 %v1100, 0.015873017
      %v1121 = vmul.f32 %v1103, 0.015873017
      %v1122 = vmul.f32 %v1106, 0.015873017
      %v1123 = vrsqrt.pop %v1107
      %v1124 = vmul.f32 %v1107, %v1123
      %vm1125 = vcmp.eq.f32.partialorder %v1107, inf
      %v1126 = vsel %vm1125, %v1107, %v1124
      %vm1127 = vcmp.eq.f32.partialorder %v1107, 0.0
      %v1128 = vand.u32 %v1107, 2147483648
      %v1129 = vsel %vm1127, %v1128, %v1126
      %v1130 = vrsqrt.pop %v1108
      %v1131 = vmul.f32 %v1108, %v1130
      %vm1132 = vcmp.eq.f32.partialorder %v1108, inf
      %v1133 = vsel %vm1132, %v1108, %v1131
      %vm1134 = vcmp.eq.f32.partialorder %v1108, 0.0
      %v1135 = vand.u32 %v1108, 2147483648
      %v1136 = vsel %vm1134, %v1135, %v1133
      %v1137 = vrsqrt.pop %v1109
      %v1138 = vmul.f32 %v1109, %v1137
      %vm1139 = vcmp.eq.f32.partialorder %v1109, inf
      %v1140 = vsel %vm1139, %v1109, %v1138
      %vm1141 = vcmp.eq.f32.partialorder %v1109, 0.0
      %v1142 = vand.u32 %v1109, 2147483648
      %v1143 = vsel %vm1141, %v1142, %v1140
      %v1144 = vrsqrt.pop %v1110
      %v1145 = vmul.f32 %v1110, %v1144
      %vm1146 = vcmp.eq.f32.partialorder %v1110, inf
      %v1147 = vsel %vm1146, %v1110, %v1145
      %vm1148 = vcmp.eq.f32.partialorder %v1110, 0.0
      %v1149 = vand.u32 %v1110, 2147483648
      %v1150 = vsel %vm1148, %v1149, %v1147
      %v1151 = vrsqrt.pop %v1111
      %v1152 = vmul.f32 %v1111, %v1151
      %vm1153 = vcmp.eq.f32.partialorder %v1111, inf
      %v1154 = vsel %vm1153, %v1111, %v1152
      %vm1155 = vcmp.eq.f32.partialorder %v1111, 0.0
      %v1156 = vand.u32 %v1111, 2147483648
      %v1157 = vsel %vm1155, %v1156, %v1154
      %v1158 = vrsqrt.pop %v1112
      %v1159 = vmul.f32 %v1112, %v1158
      %vm1160 = vcmp.eq.f32.partialorder %v1112, inf
      %v1161 = vsel %vm1160, %v1112, %v1159
      %vm1162 = vcmp.eq.f32.partialorder %v1112, 0.0
      %v1163 = vand.u32 %v1112, 2147483648
      %v1164 = vsel %vm1162, %v1163, %v1161
      %v1165 = vrsqrt.pop %v1113
      %v1166 = vmul.f32 %v1113, %v1165
      %vm1167 = vcmp.eq.f32.partialorder %v1113, inf
      %v1168 = vsel %vm1167, %v1113, %v1166
      %vm1169 = vcmp.eq.f32.partialorder %v1113, 0.0
      %v1170 = vand.u32 %v1113, 2147483648
      %v1171 = vsel %vm1169, %v1170, %v1168
      %v1172 = vrsqrt.pop %v1114
      %v1173 = vmul.f32 %v1114, %v1172
      %vm1174 = vcmp.eq.f32.partialorder %v1114, inf
      %v1175 = vsel %vm1174, %v1114, %v1173
      %vm1176 = vcmp.eq.f32.partialorder %v1114, 0.0
      %v1177 = vand.u32 %v1114, 2147483648
      %v1178 = vsel %vm1176, %v1177, %v1175
      %v1179 = vrsqrt.pop %v1115
      %v1180 = vmul.f32 %v1115, %v1179
      %vm1181 = vcmp.eq.f32.partialorder %v1115, inf
      %v1182 = vsel %vm1181, %v1115, %v1180
      %vm1183 = vcmp.eq.f32.partialorder %v1115, 0.0
      %v1184 = vand.u32 %v1115, 2147483648
      %v1185 = vsel %vm1183, %v1184, %v1182
      %v1186 = vrsqrt.pop %v1116
      %v1187 = vmul.f32 %v1116, %v1186
      %vm1188 = vcmp.eq.f32.partialorder %v1116, inf
      %v1189 = vsel %vm1188, %v1116, %v1187
      %vm1190 = vcmp.eq.f32.partialorder %v1116, 0.0
      %v1191 = vand.u32 %v1116, 2147483648
      %v1192 = vsel %vm1190, %v1191, %v1189
      %v1193 = vrsqrt.pop %v1117
      %v1194 = vmul.f32 %v1117, %v1193
      %vm1195 = vcmp.eq.f32.partialorder %v1117, inf
      %v1196 = vsel %vm1195, %v1117, %v1194
      %vm1197 = vcmp.eq.f32.partialorder %v1117, 0.0
      %v1198 = vand.u32 %v1117, 2147483648
      %v1199 = vsel %vm1197, %v1198, %v1196
      %v1200 = vrsqrt.pop %v1118
      %v1201 = vmul.f32 %v1118, %v1200
      %vm1202 = vcmp.eq.f32.partialorder %v1118, inf
      %v1203 = vsel %vm1202, %v1118, %v1201
      %vm1204 = vcmp.eq.f32.partialorder %v1118, 0.0
      %v1205 = vand.u32 %v1118, 2147483648
      %v1206 = vsel %vm1204, %v1205, %v1203
      %v1207 = vrsqrt.pop %v1119
      %v1208 = vmul.f32 %v1119, %v1207
      %vm1209 = vcmp.eq.f32.partialorder %v1119, inf
      %v1210 = vsel %vm1209, %v1119, %v1208
      %vm1211 = vcmp.eq.f32.partialorder %v1119, 0.0
      %v1212 = vand.u32 %v1119, 2147483648
      %v1213 = vsel %vm1211, %v1212, %v1210
      %v1214 = vrsqrt.pop %v1120
      %v1215 = vmul.f32 %v1120, %v1214
      %vm1216 = vcmp.eq.f32.partialorder %v1120, inf
      %v1217 = vsel %vm1216, %v1120, %v1215
      %vm1218 = vcmp.eq.f32.partialorder %v1120, 0.0
      %v1219 = vand.u32 %v1120, 2147483648
      %v1220 = vsel %vm1218, %v1219, %v1217
      %v1221 = vrsqrt.pop %v1121
      %v1222 = vmul.f32 %v1121, %v1221
      %vm1223 = vcmp.eq.f32.partialorder %v1121, inf
      %v1224 = vsel %vm1223, %v1121, %v1222
      %vm1225 = vcmp.eq.f32.partialorder %v1121, 0.0
      %v1226 = vand.u32 %v1121, 2147483648
      %v1227 = vsel %vm1225, %v1226, %v1224
      %v1228 = vrsqrt.pop %v1122
      %v1229 = vmul.f32 %v1122, %v1228
      %vm1230 = vcmp.eq.f32.partialorder %v1122, inf
      %v1231 = vsel %vm1230, %v1122, %v1229
      %vm1232 = vcmp.eq.f32.partialorder %v1122, 0.0
      %v1233 = vand.u32 %v1122, 2147483648
      %v1234 = vsel %vm1232, %v1233, %v1231
      %v1235 = vadd.f32 %v1129, 1e-06
      %v1236 = vadd.f32 %v1136, 1e-06
      %v1237 = vadd.f32 %v1143, 1e-06
      %v1238 = vadd.f32 %v1150, 1e-06
      %v1239 = vadd.f32 %v1157, 1e-06
      %v1240 = vadd.f32 %v1164, 1e-06
      %v1241 = vadd.f32 %v1171, 1e-06
      %v1242 = vadd.f32 %v1178, 1e-06
      %v1243 = vadd.f32 %v1185, 1e-06
      %v1244 = vadd.f32 %v1192, 1e-06
      %v1245 = vadd.f32 %v1199, 1e-06
      %v1246 = vadd.f32 %v1206, 1e-06
      %v1247 = vadd.f32 %v1213, 1e-06
      %v1248 = vadd.f32 %v1220, 1e-06
      %v1249 = vadd.f32 %v1227, 1e-06
      %v1250 = vadd.f32 %v1234, 1e-06
      %v1251 = vrcp.pop %v1235
      %v1252 = vrcp.pop %v1236
      %v1253 = vrcp.pop %v1237
      %v1254 = vrcp.pop %v1238
      %v1255 = vrcp.pop %v1239
      %v1256 = vrcp.pop %v1240
      %v1257 = vrcp.pop %v1241
      %v1258 = vrcp.pop %v1242
      %v1259 = vrcp.pop %v1243
      %v1260 = vrcp.pop %v1244
      %v1261 = vrcp.pop %v1245
      %v1262 = vrcp.pop %v1246
      %v1263 = vrcp.pop %v1247
      %v1264 = vrcp.pop %v1248
      %v1265 = vrcp.pop %v1249
      %v1266 = vrcp.pop %v1250
      %v1267 = vlaneseq
      %v1268 = vshrl.u32 %v1267, 7
      %v1269 = vsub.s32 0, %v1268
      %v1270 = vrot.slane %v961, %v1269
      %v1271 = vmul.f32 %v1270, %v1027
      %v1272 = vmul.f32 %v1270, %v1028
      %v1273 = vmul.f32 %v1270, %v1029
      %v1274 = vmul.f32 %v1270, %v1030
      %v1275 = vmul.f32 %v1270, %v1031
      %v1276 = vmul.f32 %v1270, %v1032
      %v1277 = vmul.f32 %v1270, %v1033
      %v1278 = vmul.f32 %v1270, %v1034
      %v1279 = vmul.f32 %v1270, %v1035
      %v1280 = vmul.f32 %v1270, %v1036
      %v1281 = vmul.f32 %v1270, %v1037
      %v1282 = vmul.f32 %v1270, %v1038
      %v1283 = vmul.f32 %v1270, %v1039
      %v1284 = vmul.f32 %v1270, %v1040
      %v1285 = vmul.f32 %v1270, %v1041
      %v1286 = vmul.f32 %v1270, %v1042
      %v1287 = vmul.f32 %v1271, %v1251
      %v1288 = vmul.f32 %v1272, %v1252
      %v1289 = vmul.f32 %v1273, %v1253
      %v1290 = vmul.f32 %v1274, %v1254
      %v1291 = vmul.f32 %v1275, %v1255
      %v1292 = vmul.f32 %v1276, %v1256
      %v1293 = vmul.f32 %v1277, %v1257
      %v1294 = vmul.f32 %v1278, %v1258
      %v1295 = vmul.f32 %v1279, %v1259
      %v1296 = vmul.f32 %v1280, %v1260
      %v1297 = vmul.f32 %v1281, %v1261
      %v1298 = vmul.f32 %v1282, %v1262
      %v1299 = vmul.f32 %v1283, %v1263
      %v1300 = vmul.f32 %v1284, %v1264
      %v1301 = vmul.f32 %v1285, %v1265
      %v1302 = vmul.f32 %v1286, %v1266
      %v1303 = vlaneseq
      %v1304 = vshrl.u32 %v1303, 7
      %v1305 = vsub.s32 0, %v1304
      %v1306 = vrot.slane %v962, %v1305
      %v1307 = vadd.f32 %v1287, %v1306
      %v1308 = vadd.f32 %v1288, %v1306
      %v1309 = vadd.f32 %v1289, %v1306
      %v1310 = vadd.f32 %v1290, %v1306
      %v1311 = vadd.f32 %v1291, %v1306
      %v1312 = vadd.f32 %v1292, %v1306
      %v1313 = vadd.f32 %v1293, %v1306
      %v1314 = vadd.f32 %v1294, %v1306
      %v1315 = vadd.f32 %v1295, %v1306
      %v1316 = vadd.f32 %v1296, %v1306
      %v1317 = vadd.f32 %v1297, %v1306
      %v1318 = vadd.f32 %v1298, %v1306
      %v1319 = vadd.f32 %v1299, %v1306
      %v1320 = vadd.f32 %v1300, %v1306
      %v1321 = vadd.f32 %v1301, %v1306
      %v1322 = vadd.f32 %v1302, %v1306
      %v1323 = vtanh.pop %v1307
      %v1324 = vtanh.pop %v1308
      %v1325 = vtanh.pop %v1309
      %v1326 = vtanh.pop %v1310
      %v1327 = vtanh.pop %v1311
      %v1328 = vtanh.pop %v1312
      %v1329 = vtanh.pop %v1313
      %v1330 = vtanh.pop %v1314
      %v1331 = vtanh.pop %v1315
      %v1332 = vtanh.pop %v1316
      %v1333 = vtanh.pop %v1317
      %v1334 = vtanh.pop %v1318
      %v1335 = vtanh.pop %v1319
      %v1336 = vtanh.pop %v1320
      %v1337 = vtanh.pop %v1321
      %v1338 = vtanh.pop %v1322
      %v1339 = vlaneseq
      %v1340 = vshrl.u32 %v1339, 7
      %v1341 = vsub.s32 0, %v1340
      %v1342 = vrot.slane %v185, %v1341
      %v1344 = vsel %vm386, %v1323, 0
      %v1347 = vsel %vm386, %v1324, 0
      %v1350 = vsel %vm386, %v1325, 0
      %v1353 = vsel %vm386, %v1326, 0
      %v1356 = vsel %vm386, %v1327, 0
      %v1359 = vsel %vm386, %v1328, 0
      %v1362 = vsel %vm386, %v1329, 0
      %v1365 = vsel %vm386, %v1330, 0
      %v1368 = vsel %vm386, %v1331, 0
      %v1371 = vsel %vm386, %v1332, 0
      %v1374 = vsel %vm386, %v1333, 0
      %v1377 = vsel %vm386, %v1334, 0
      %v1380 = vsel %vm386, %v1335, 0
      %v1383 = vsel %vm386, %v1336, 0
      %v1386 = vsel %vm386, %v1337, 0
      %v1389 = vsel %vm386, %v1338, 0
      %1391 = vmatprep.subr.mxu0 0.0
      %1392 = vmatpush1.msra.mxu0 0.0
      %1393 = vmatprep.subr.mxu0 0.0
      %1394 = vmatpush1.msra.mxu0 0.0
      %1395 = vmatprep.subr.mxu0 0.0
      %1396 = vmatpush1.msra.mxu0 0.0
      %1397 = vmatprep.subr.mxu0 0.0
      %1398 = vmatpush1.msra.mxu0 0.0
      %1399 = vmatprep.subr.mxu0 0.0
      %1400 = vmatpush1.msra.mxu0 0.0
      %1401 = vmatprep.subr.mxu0 0.0
      %1402 = vmatpush1.msra.mxu0 0.0
      %1403 = vmatprep.subr.mxu0 0.0
      %1404 = vmatpush1.msra.mxu0 0.0
      %1405 = vmatprep.subr.mxu0 0.0
      %1406 = vmatpush1.msra.mxu0 0.0
      %1407 = vmatprep.subr.mxu0 0.0
      %1408 = vmatpush1.msra.mxu0 %v182
      %1409 = vmatprep.subr.mxu0 0.0
      %1410 = vmatpush1.msra.mxu0 %v181
      %1411 = vmatprep.subr.mxu0 0.0
      %1412 = vmatpush1.msra.mxu0 %v180
      %1413 = vmatprep.subr.mxu0 0.0
      %1414 = vmatpush1.msra.mxu0 %v179
      %1415 = vmatprep.subr.mxu0 0.0
      %1416 = vmatpush1.msra.mxu0 %v178
      %1417 = vmatprep.subr.mxu0 0.0
      %1418 = vmatpush1.msra.mxu0 %v177
      %1419 = vmatprep.subr.mxu0 0.0
      %1420 = vmatpush1.msra.mxu0 %v176
      %1421 = vmatprep.subr.mxu0 0.0
      %1422 = vmatpush1.msra.mxu0 %v175
      %1423 = vmatprep.subr.mxu0 0.0
      %1424 = vmatpush2.msra.mxu0 0.0
      %1425 = vmatprep.subr.mxu0 0.0
      %1426 = vmatpush2.msra.mxu0 0.0
      %1427 = vmatprep.subr.mxu0 0.0
      %1428 = vmatpush2.msra.mxu0 0.0
      %1429 = vmatprep.subr.mxu0 0.0
      %1430 = vmatpush2.msra.mxu0 0.0
      %1431 = vmatprep.subr.mxu0 0.0
      %1432 = vmatpush2.msra.mxu0 0.0
      %1433 = vmatprep.subr.mxu0 0.0
      %1434 = vmatpush2.msra.mxu0 0.0
      %1435 = vmatprep.subr.mxu0 0.0
      %1436 = vmatpush2.msra.mxu0 0.0
      %1437 = vmatprep.subr.mxu0 0.0
      %1438 = vmatpush2.msra.mxu0 0.0
      %1439 = vmatprep.subr.mxu0 0.0
      %1440 = vmatpush2.msra.mxu0 0.0
      %1441 = vmatprep.subr.mxu0 0.0
      %1442 = vmatpush2.msra.mxu0 0.0
      %1443 = vmatprep.subr.mxu0 0.0
      %1444 = vmatpush2.msra.mxu0 0.0
      %1445 = vmatprep.subr.mxu0 0.0
      %1446 = vmatpush2.msra.mxu0 0.0
      %1447 = vmatprep.subr.mxu0 0.0
      %1448 = vmatpush2.msra.mxu0 0.0
      %1449 = vmatprep.subr.mxu0 0.0
      %1450 = vmatpush2.msra.mxu0 0.0
      %1451 = vmatprep.subr.mxu0 0.0
      %1452 = vmatpush2.msra.mxu0 0.0
      %1453 = vmatprep.subr.mxu0 0.0
      %1454 = vmatpush2.msra.mxu0 0.0
      %1455 = vmatprep.mubr.f32.mxu0 0.0
      %1456 = vmatmul.mubr.f32.gmra.mxu0 %v1344
      %v1457 = vpop.f32.mrf.mxu0
      %v1458 = vadd.f32 %v1342, %v1457
      %v1459 = vpop.f32.mrf.mxu0
      %1460 = vmatprep.mubr.f32.mxu0 0.0
      %1461 = vmatmul.mubr.f32.gmra.mxu0 %v1347
      %v1462 = vpop.f32.mrf.mxu0
      %v1463 = vadd.f32 %v1342, %v1462
      %v1464 = vpop.f32.mrf.mxu0
      %1465 = vmatprep.mubr.f32.mxu0 0.0
      %1466 = vmatmul.mubr.f32.gmra.mxu0 %v1350
      %v1467 = vpop.f32.mrf.mxu0
      %v1468 = vadd.f32 %v1342, %v1467
      %v1469 = vpop.f32.mrf.mxu0
      %1470 = vmatprep.mubr.f32.mxu0 0.0
      %1471 = vmatmul.mubr.f32.gmra.mxu0 %v1353
      %v1472 = vpop.f32.mrf.mxu0
      %v1473 = vadd.f32 %v1342, %v1472
      %v1474 = vpop.f32.mrf.mxu0
      %1475 = vmatprep.mubr.f32.mxu0 0.0
      %1476 = vmatmul.mubr.f32.gmra.mxu0 %v1356
      %v1477 = vpop.f32.mrf.mxu0
      %v1478 = vadd.f32 %v1342, %v1477
      %v1479 = vpop.f32.mrf.mxu0
      %1480 = vmatprep.mubr.f32.mxu0 0.0
      %1481 = vmatmul.mubr.f32.gmra.mxu0 %v1359
      %v1482 = vpop.f32.mrf.mxu0
      %v1483 = vadd.f32 %v1342, %v1482
      %v1484 = vpop.f32.mrf.mxu0
      %1485 = vmatprep.mubr.f32.mxu0 0.0
      %1486 = vmatmul.mubr.f32.gmra.mxu0 %v1362
      %v1487 = vpop.f32.mrf.mxu0
      %v1488 = vadd.f32 %v1342, %v1487
      %v1489 = vpop.f32.mrf.mxu0
      %1490 = vmatprep.mubr.f32.mxu0 0.0
      %1491 = vmatmul.mubr.f32.gmra.mxu0 %v1365
      %v1492 = vpop.f32.mrf.mxu0
      %v1493 = vadd.f32 %v1342, %v1492
      %v1494 = vpop.f32.mrf.mxu0
      %1495 = vmatprep.mubr.f32.mxu0 0.0
      %1496 = vmatmul.mubr.f32.gmra.mxu0 %v1368
      %v1497 = vpop.f32.mrf.mxu0
      %v1498 = vadd.f32 %v1342, %v1497
      %v1499 = vpop.f32.mrf.mxu0
      %1500 = vmatprep.mubr.f32.mxu0 0.0
      %1501 = vmatmul.mubr.f32.gmra.mxu0 %v1371
      %v1502 = vpop.f32.mrf.mxu0
      %v1503 = vadd.f32 %v1342, %v1502
      %v1504 = vpop.f32.mrf.mxu0
      %1505 = vmatprep.mubr.f32.mxu0 0.0
      %1506 = vmatmul.mubr.f32.gmra.mxu0 %v1374
      %v1507 = vpop.f32.mrf.mxu0
      %v1508 = vadd.f32 %v1342, %v1507
      %v1509 = vpop.f32.mrf.mxu0
      %1510 = vmatprep.mubr.f32.mxu0 0.0
      %1511 = vmatmul.mubr.f32.gmra.mxu0 %v1377
      %v1512 = vpop.f32.mrf.mxu0
      %v1513 = vadd.f32 %v1342, %v1512
      %v1514 = vpop.f32.mrf.mxu0
      %1515 = vmatprep.mubr.f32.mxu0 0.0
      %1516 = vmatmul.mubr.f32.gmra.mxu0 %v1380
      %v1517 = vpop.f32.mrf.mxu0
      %v1518 = vadd.f32 %v1342, %v1517
      %v1519 = vpop.f32.mrf.mxu0
      %1520 = vmatprep.mubr.f32.mxu0 0.0
      %1521 = vmatmul.mubr.f32.gmra.mxu0 %v1383
      %v1522 = vpop.f32.mrf.mxu0
      %v1523 = vadd.f32 %v1342, %v1522
      %v1524 = vpop.f32.mrf.mxu0
      %1525 = vmatprep.mubr.f32.mxu0 0.0
      %1526 = vmatmul.mubr.f32.gmra.mxu0 %v1386
      %v1527 = vpop.f32.mrf.mxu0
      %v1528 = vadd.f32 %v1342, %v1527
      %v1529 = vpop.f32.mrf.mxu0
      %1530 = vmatprep.mubr.f32.mxu0 0.0
      %1531 = vmatmul.mubr.f32.gmra.mxu0 %v1389
      %v1532 = vpop.f32.mrf.mxu0
      %v1533 = vadd.f32 %v1342, %v1532
      %v1534 = vpop.f32.mrf.mxu0
      %1535 = vdwg.mxu0
      %v1536 = vtanh.pop %v1458
      %v1537 = vtanh.pop %v1463
      %v1538 = vtanh.pop %v1468
      %v1539 = vtanh.pop %v1473
      %v1540 = vtanh.pop %v1478
      %v1541 = vtanh.pop %v1483
      %v1542 = vtanh.pop %v1488
      %v1543 = vtanh.pop %v1493
      %v1544 = vtanh.pop %v1498
      %v1545 = vtanh.pop %v1503
      %v1546 = vtanh.pop %v1508
      %v1547 = vtanh.pop %v1513
      %v1548 = vtanh.pop %v1518
      %v1549 = vtanh.pop %v1523
      %v1550 = vtanh.pop %v1528
      %v1551 = vtanh.pop %v1533
      %vm1552 = vcmask 130048
      %1553 = vst.msk [vmem:[%s145] sm:$0xff] %vm1552, %v1536
      %1554 = vst.msk [vmem:[%s145 + $0x8] sm:$0xff] %vm1552, %v1537
      %1555 = vst.msk [vmem:[%s145 + $0x10] sm:$0xff] %vm1552, %v1538
      %1556 = vst.msk [vmem:[%s145 + $0x18] sm:$0xff] %vm1552, %v1539
      %1557 = vst.msk [vmem:[%s145 + $0x20] sm:$0xff] %vm1552, %v1540
      %1558 = vst.msk [vmem:[%s145 + $0x28] sm:$0xff] %vm1552, %v1541
      %1559 = vst.msk [vmem:[%s145 + $0x30] sm:$0xff] %vm1552, %v1542
      %1560 = vst.msk [vmem:[%s145 + $0x38] sm:$0xff] %vm1552, %v1543
      %1561 = vst.msk [vmem:[%s145 + $0x40] sm:$0xff] %vm1552, %v1544
      %1562 = vst.msk [vmem:[%s145 + $0x48] sm:$0xff] %vm1552, %v1545
      %1563 = vst.msk [vmem:[%s145 + $0x50] sm:$0xff] %vm1552, %v1546
      %1564 = vst.msk [vmem:[%s145 + $0x58] sm:$0xff] %vm1552, %v1547
      %1565 = vst.msk [vmem:[%s145 + $0x60] sm:$0xff] %vm1552, %v1548
      %1566 = vst.msk [vmem:[%s145 + $0x68] sm:$0xff] %vm1552, %v1549
      %1567 = vst.msk [vmem:[%s145 + $0x70] sm:$0xff] %vm1552, %v1550
      %1568 = vst.msk [vmem:[%s145 + $0x78] sm:$0xff] %vm1552, %v1551
      %s1569 = smul.u32 16, %s13
      %p1570 = scmp.lt.s32.totalorder %s1569, 31
      %s1571 = scalar_select %p1570, %s1569, 31
      %s1572 = smul.addr %s1571, 8
      %s1573 = scalar_lea.vmem %s2, %s1572
      // Predicated region
      $region29: #{tpu_custom_call.1} parent=27 // pred_check
        %p1574 = pneg %p78
      $region30: #{tpu_custom_call.1} parent=27 // pred_check_branch
        %1576 = sbr.rel (%p1574) target = $region32
      $region31: #{tpu_custom_call.1} parent=27 // pred_region
        %s1577 = smul.u32 16, %s13
      $region32: #{tpu_custom_call.1} parent=27 // pred_fallthru
        _
    $region28: #{tpu_custom_call.1} parent=5 // pred_fallthru
      _
    %p1578 = scmp.le.s32.totalorder 2, %s8
    // Predicated region
    $region33: #{tpu_custom_call.1} parent=5 // pred_check
      %p1579 = pneg %p1578
    $region34: #{tpu_custom_call.1} parent=5 // pred_check_branch
      %1581 = sbr.rel (%p1579) target = $region36
    $region35: #{tpu_custom_call.1} parent=5 // pred_region
      %s1582 = ssub.s32 %s8, 2
      // Predicated region
      $region37: #{tpu_custom_call.1} parent=35 // pred_check
        %p1583 = pneg %p84
      $region38: #{tpu_custom_call.1} parent=35 // pred_check_branch
        %1585 = sbr.rel (%p1583) target = $region40
      $region39: #{tpu_custom_call.1} parent=35 // pred_region
        %s1586 = smul.u32 16, %s14
        %p1587 = scmp.lt.s32.totalorder %s1586, 31
        %s1588 = scalar_select %p1587, %s1586, 31
        %s1589 = smul.addr %s1588, 8
        %s1590 = scalar_lea.vmem %s2, %s1589
      $region40: #{tpu_custom_call.1} parent=35 // pred_fallthru
        _
    $region36: #{tpu_custom_call.1} parent=5 // pred_fallthru
      _
  $region6: #{tpu_custom_call.1} parent=0 // loop_footer
    %s12 = sadd.s32 1, %s8
  $region7: #{tpu_custom_call.1} parent=0 // loop_footer_branch
    %7 = sbr.rel target = $region3
  $region8: #{tpu_custom_call.1} parent=0 // loop_exit
    _

</llo_original>
